<compile_context>
chip_gen: v5e
topology: v5e:2x2
jax: 0.10.0
libtpu: 0.0.40
codegen_flags: <defaults>
</compile_context>

<pallas_src>
import functools

import jax
import jax.numpy as jnp
from jax.experimental import pallas as pl
from jax.experimental.pallas import tpu as pltpu


# ----------------------------------------------------------------------------
# In-kernel helpers
# ----------------------------------------------------------------------------
def _fill_padded(xpad_ref, interior):
    """Zero-pad `interior` (H, W, C) by 1 pixel into the (H+2, W+2, C) scratch."""
    h, w = interior.shape[0], interior.shape[1]
    xpad_ref[...] = jnp.zeros(xpad_ref.shape, xpad_ref.dtype)
    xpad_ref[1:h + 1, 1:w + 1, :] = interior


def _dw3x3(xpad_ref, wd_ref, out_h, out_w, stride):
    """Raw 9-tap depthwise 3x3 on the padded VMEM scratch (stride 1 or 2).

    The BN that follows the depthwise conv is folded into the next 1x1 conv,
    so there is no per-channel affine here at all.
    """
    c = xpad_ref.shape[-1]
    acc = jnp.zeros((out_h, out_w, c), jnp.float32)
    for dy in range(3):                              # fully unrolled 9-tap MAC
        for dx in range(3):
            if stride == 1:
                win = xpad_ref[dy:dy + out_h, dx:dx + out_w, :]
            else:    # stride 2: read only the taps that are actually needed
                win = xpad_ref[pl.ds(dy, out_h, 2), pl.ds(dx, out_w, 2), :]
            acc = acc + win * wd_ref[dy, dx, :]
    return acc


def _pw(x2d, w_ref, b_ref):
    """1x1 conv (+ folded BN + ReLU) as an MXU matmul at default precision."""
    y = jnp.dot(x2d, w_ref[...], preferred_element_type=jnp.float32)
    return jnp.maximum(y + b_ref[...], 0.0)


# ----------------------------------------------------------------------------
# Fused Pallas kernels (one grid step == one image)
# ----------------------------------------------------------------------------
def _basic_block_kernel(x_ref, w1_ref, b1_ref, wd_ref, w2_ref, b2_ref,
                        o_ref, xpad_ref, *, half):
    """Fused ShuffleNet-v2 basic unit (stride 1).

    out = [ x[..., :half] | relu(dw3x3(relu(x[..., half:] @ w1 + b1)) @ w2 + b2) ]
    in un-shuffled concat order (shuffle is fused with the caller's transpose).
    """
    H, W = o_ref.shape[1], o_ref.shape[2]
    x = x_ref[0]                                              # (H, W, 2*half)

    t = _pw(x[:, :, half:].reshape(H * W, half), w1_ref, b1_ref)
    _fill_padded(xpad_ref, t.reshape(H, W, half))             # halo in VMEM
    acc = _dw3x3(xpad_ref, wd_ref, H, W, stride=1)
    y = _pw(acc.reshape(H * W, half), w2_ref, b2_ref).reshape(H, W, half)

    o_ref[:, :, :, :half] = x[None, :, :, :half].astype(o_ref.dtype)
    o_ref[:, :, :, half:] = y[None].astype(o_ref.dtype)


def _down_block_kernel(x_ref, wd1_ref, w1_ref, b1_ref,
                       wa_ref, ba_ref, wd2_ref, wb_ref, bb_ref,
                       o_ref, xpad1_ref, xpad2_ref, *, half):
    """Fused ShuffleNet-v2 downsample unit (stride 2).

    branch1 = relu(dw3x3_s2(x)                 @ w1 + b1)
    branch2 = relu(dw3x3_s2(relu(x @ wa + ba)) @ wb + bb)
    out     = [ branch1 | branch2 ]   (un-shuffled concat order)
    """
    H, W, cin = x_ref.shape[1], x_ref.shape[2], x_ref.shape[3]
    ho, wo = H // 2, W // 2
    x = x_ref[0]                                              # (H, W, cin)

    # branch 1: dw3x3 s2 -> 1x1 + ReLU (both BNs folded into w1/b1)
    _fill_padded(xpad1_ref, x)
    acc1 = _dw3x3(xpad1_ref, wd1_ref, ho, wo, stride=2)
    b1 = _pw(acc1.reshape(ho * wo, cin), w1_ref, b1_ref).reshape(ho, wo, half)

    # branch 2: 1x1 + ReLU -> dw3x3 s2 -> 1x1 + ReLU
    t = _pw(x.reshape(H * W, cin), wa_ref, ba_ref)
    _fill_padded(xpad2_ref, t.reshape(H, W, half))
    acc2 = _dw3x3(xpad2_ref, wd2_ref, ho, wo, stride=2)
    b2 = _pw(acc2.reshape(ho * wo, half), wb_ref, bb_ref).reshape(ho, wo, half)

    o_ref[:, :, :, :half] = b1[None].astype(o_ref.dtype)
    o_ref[:, :, :, half:] = b2[None].astype(o_ref.dtype)


# ----------------------------------------------------------------------------
# BN folding (done once on the tiny weight tensors, outside the kernels)
# ----------------------------------------------------------------------------
def _fold_pw(w, s):
    """Fold the BN scale that follows a 1x1 conv into its weight columns."""
    return w * s[None, :]


def _fold_dw_through_pw(dw_s, dw_b, w_pw, s_pw, b_pw):
    """Fold `dw-conv -> BN(dw_s, dw_b) -> 1x1(w_pw) -> BN(s_pw, b_pw)` into one
    (weight, bias) applied to the *raw* depthwise-conv output."""
    w_cols = w_pw * s_pw[None, :]                       # BN after the 1x1
    w = dw_s[:, None] * w_cols                          # dw BN scale -> rows
    b = jnp.sum(dw_b[:, None] * w_cols, axis=0) + b_pw  # dw BN bias  -> bias
    return w, b


# ----------------------------------------------------------------------------
# Forward wrapper (NCHW public API, like the PyTorch module)
# ----------------------------------------------------------------------------
def shuffle_block_forward(x_nchw, params, downsample=False):
    x = jnp.transpose(x_nchw, (0, 2, 3, 1)).astype(jnp.float32)   # -> NHWC
    N, H, W, Cin = x.shape
    p = params
    cp = pltpu.CompilerParams(dimension_semantics=("parallel",))

    if downsample:
        assert H % 2 == 0 and W % 2 == 0
        ho, wo = H // 2, W // 2
        wd1 = p['b1_dw_w']
        w1, b1 = _fold_dw_through_pw(p['b1_dw_s'], p['b1_dw_b'],
                                     p['b1_pw_w'], p['b1_pw_s'], p['b1_pw_b'])
        wa = _fold_pw(p['b2_pw1_w'], p['b2_pw1_s'])
        ba = p['b2_pw1_b']
        wd2 = p['b2_dw_w']
        wb, bb = _fold_dw_through_pw(p['b2_dw_s'], p['b2_dw_b'],
                                     p['b2_pw2_w'], p['b2_pw2_s'], p['b2_pw2_b'])
        half = w1.shape[1]
        out_c = 2 * half

        out = pl.pallas_call(
            functools.partial(_down_block_kernel, half=half),
            out_shape=jax.ShapeDtypeStruct((N, ho, wo, out_c), jnp.float32),
            grid=(N,),
            in_specs=[
                pl.BlockSpec((1, H, W, Cin), lambda n: (n, 0, 0, 0)),
                pl.BlockSpec((3, 3, Cin), lambda n: (0, 0, 0)),
                pl.BlockSpec((Cin, half), lambda n: (0, 0)),
                pl.BlockSpec((1, half), lambda n: (0, 0)),
                pl.BlockSpec((Cin, half), lambda n: (0, 0)),
                pl.BlockSpec((1, half), lambda n: (0, 0)),
                pl.BlockSpec((3, 3, half), lambda n: (0, 0, 0)),
                pl.BlockSpec((half, half), lambda n: (0, 0)),
                pl.BlockSpec((1, half), lambda n: (0, 0)),
            ],
            out_specs=pl.BlockSpec((1, ho, wo, out_c), lambda n: (n, 0, 0, 0)),
            scratch_shapes=[
                pltpu.VMEM((H + 2, W + 2, Cin), jnp.float32),    # branch-1 halo
                pltpu.VMEM((H + 2, W + 2, half), jnp.float32),   # branch-2 halo
            ],
            compiler_params=cp,
        )(x, wd1, w1, b1.reshape(1, half), wa, ba.reshape(1, half),
          wd2, wb, bb.reshape(1, half))
        hout, wout = ho, wo
    else:
        half = Cin // 2
        out_c = Cin
        w1 = _fold_pw(p['pw1_w'], p['pw1_s'])
        b1 = p['pw1_b']
        wd = p['dw_w']
        w2, b2 = _fold_dw_through_pw(p['dw_s'], p['dw_b'],
                                     p['pw2_w'], p['pw2_s'], p['pw2_b'])

        out = pl.pallas_call(
            functools.partial(_basic_block_kernel, half=half),
            out_shape=jax.ShapeDtypeStruct((N, H, W, out_c), jnp.float32),
            grid=(N,),
            in_specs=[
                pl.BlockSpec((1, H, W, Cin), lambda n: (n, 0, 0, 0)),
                pl.BlockSpec((half, half), lambda n: (0, 0)),
                pl.BlockSpec((1, half), lambda n: (0, 0)),
                pl.BlockSpec((3, 3, half), lambda n: (0, 0, 0)),
                pl.BlockSpec((half, half), lambda n: (0, 0)),
                pl.BlockSpec((1, half), lambda n: (0, 0)),
            ],
            out_specs=pl.BlockSpec((1, H, W, out_c), lambda n: (n, 0, 0, 0)),
            scratch_shapes=[pltpu.VMEM((H + 2, W + 2, half), jnp.float32)],
            compiler_params=cp,
        )(x, w1, b1.reshape(1, half), wd, w2, b2.reshape(1, half))
        hout, wout = H, W

    # channel shuffle (groups=2) fused with the NHWC->NCHW transpose the NCHW
    # API needs anyway: out_nchw[:, gc*2 + g] = concat_nchw[:, g*half + gc]
    half = out_c // 2
    out = jnp.transpose(out, (0, 3, 1, 2))                 # NCHW, concat order
    out = out.reshape(N, 2, half, hout, wout)
    out = jnp.swapaxes(out, 1, 2).reshape(N, out_c, hout, wout)
    return out


# ----------------------------------------------------------------------------
# Deterministic parameter init (BN expressed as folded per-channel scale/bias)
# ----------------------------------------------------------------------------
def _bn_fold(key, c, eps=1e-5):
    k1, k2, k3, k4 = jax.random.split(key, 4)
    gamma = 1.0 + 0.1 * jax.random.normal(k1, (c,), jnp.float32)
    beta = 0.1 * jax.random.normal(k2, (c,), jnp.float32)
    mean = 0.1 * jax.random.normal(k3, (c,), jnp.float32)
    var = jax.random.uniform(k4, (c,), jnp.float32, minval=0.5, maxval=1.5)
    scale = gamma / jnp.sqrt(var + eps)
    bias = beta - mean * scale
    return scale, bias


def init_shuffle_block_params(key, in_c, out_c, downsample):
    half = out_c // 2
    keys = jax.random.split(key, 10)
    w_pw = lambda k, ci, co: 0.3 * jax.random.normal(k, (ci, co), jnp.float32)
    w_dw = lambda k, c: 0.3 * jax.random.normal(k, (3, 3, c), jnp.float32)
    p = {}
    if downsample:
        p['b1_dw_w'] = w_dw(keys[0], in_c)
        p['b1_dw_s'], p['b1_dw_b'] = _bn_fold(keys[1], in_c)
        p['b1_pw_w'] = w_pw(keys[2], in_c, half)
        p['b1_pw_s'], p['b1_pw_b'] = _bn_fold(keys[3], half)
        p['b2_pw1_w'] = w_pw(keys[4], in_c, half)
        p['b2_pw1_s'], p['b2_pw1_b'] = _bn_fold(keys[5], half)
        p['b2_dw_w'] = w_dw(keys[6], half)
        p['b2_dw_s'], p['b2_dw_b'] = _bn_fold(keys[7], half)
        p['b2_pw2_w'] = w_pw(keys[8], half, half)
        p['b2_pw2_s'], p['b2_pw2_b'] = _bn_fold(keys[9], half)
    else:
        assert in_c == out_c
        p['pw1_w'] = w_pw(keys[0], half, half)
        p['pw1_s'], p['pw1_b'] = _bn_fold(keys[1], half)
        p['dw_w'] = w_dw(keys[2], half)
        p['dw_s'], p['dw_b'] = _bn_fold(keys[3], half)
        p['pw2_w'] = w_pw(keys[4], half, half)
        p['pw2_s'], p['pw2_b'] = _bn_fold(keys[5], half)
    return p


# ----------------------------------------------------------------------------
# Pure-JAX reference (lax.conv, HIGHEST precision) for correctness checking
# ----------------------------------------------------------------------------
def channel_shuffle_nhwc(x, groups=2):
    N, H, W, C = x.shape
    gc = C // groups
    x = x.reshape(N, H, W, groups, gc)
    x = jnp.swapaxes(x, 3, 4)
    return x.reshape(N, H, W, C)


def _conv1x1_ref(x, w):
    return jax.lax.conv_general_dilated(
        x, w[None, None, :, :], (1, 1), 'VALID',
        dimension_numbers=('NHWC', 'HWIO', 'NHWC'),
        precision=jax.lax.Precision.HIGHEST)


def _dw3x3_ref(x, w, stride):
    C = x.shape[-1]
    rhs = w[:, :, None, :]  # (3,3,1,C) HWIO, groups=C
    return jax.lax.conv_general_dilated(
        x, rhs, (stride, stride), ((1, 1), (1, 1)),
        dimension_numbers=('NHWC', 'HWIO', 'NHWC'),
        feature_group_count=C, precision=jax.lax.Precision.HIGHEST)


def shuffle_block_reference(x_nchw, params, downsample=False):
    x = jnp.transpose(x_nchw, (0, 2, 3, 1)).astype(jnp.float32)
    p = params
    relu = lambda v: jnp.maximum(v, 0.0)
    aff = lambda v, s, b: v * s + b
    if downsample:
        b1 = aff(_dw3x3_ref(x, p['b1_dw_w'], 2), p['b1_dw_s'], p['b1_dw_b'])
        b1 = relu(aff(_conv1x1_ref(b1, p['b1_pw_w']), p['b1_pw_s'], p['b1_pw_b']))
        b2 = relu(aff(_conv1x1_ref(x, p['b2_pw1_w']), p['b2_pw1_s'], p['b2_pw1_b']))
        b2 = aff(_dw3x3_ref(b2, p['b2_dw_w'], 2), p['b2_dw_s'], p['b2_dw_b'])
        b2 = relu(aff(_conv1x1_ref(b2, p['b2_pw2_w']), p['b2_pw2_s'], p['b2_pw2_b']))
        out = jnp.concatenate([b1, b2], axis=-1)
    else:
        C = x.shape[-1]
        half = C // 2
        x1 = x[..., :half]
        x2 = x[..., half:]
        y = relu(aff(_conv1x1_ref(x2, p['pw1_w']), p['pw1_s'], p['pw1_b']))
        y = aff(_dw3x3_ref(y, p['dw_w'], 1), p['dw_s'], p['dw_b'])
        y = relu(aff(_conv1x1_ref(y, p['pw2_w']), p['pw2_s'], p['pw2_b']))
        out = jnp.concatenate([x1, y], axis=-1)
    out = channel_shuffle_nhwc(out, groups=2)
    return jnp.transpose(out, (0, 3, 1, 2))


# ----------------------------------------------------------------------------
if __name__ == "__main__":
    key = jax.random.PRNGKey(0)
    kx, kp1, kp2 = jax.random.split(key, 3)
    x = jax.random.normal(kx, (2, 4, 16, 16), jnp.float32)  # NCHW

    fwd_basic = jax.jit(functools.partial(shuffle_block_forward, downsample=False))
    fwd_down = jax.jit(functools.partial(shuffle_block_forward, downsample=True))

    # Basic unit (downsample=False, in_c == out_c == 4)
    p1 = init_shuffle_block_params(kp1, in_c=4, out_c=4, downsample=False)
    out1 = jax.block_until_ready(fwd_basic(x, p1))
    ref1 = jax.block_until_ready(shuffle_block_reference(x, p1, downsample=False))
    assert out1.shape == (2, 4, 16, 16)
    # Kernel matmuls use default MXU precision (bf16 multiply / f32 accumulate);
    # the reference is HIGHEST f32 -> compare at bf16-level tolerance.
    err1 = float(jnp.max(jnp.abs(out1 - ref1)))
    rel1 = float(jnp.linalg.norm(out1 - ref1) / (jnp.linalg.norm(ref1) + 1e-12))
    assert err1 < 5e-2 and rel1 < 1e-2, (err1, rel1)

    # Downsample unit (in_c=4 -> out_c=8, spatial /2)
    p2 = init_shuffle_block_params(kp2, in_c=4, out_c=8, downsample=True)
    out2 = jax.block_until_ready(fwd_down(x, p2))
    ref2 = jax.block_until_ready(shuffle_block_reference(x, p2, downsample=True))
    assert out2.shape == (2, 8, 8, 8)
    err2 = float(jnp.max(jnp.abs(out2 - ref2)))
    rel2 = float(jnp.linalg.norm(out2 - ref2) / (jnp.linalg.norm(ref2) + 1e-12))
    assert err2 < 5e-2 and rel2 < 1e-2, (err2, rel2)

    print("KERNEL_OK")
</pallas_src>

<mosaic_0001>
module attributes {stable_mosaic.version = 11 : i64} {
  func.func @_basic_block_kernel(%arg0: i32, %arg1: memref<1x16x16x4xf32, #tpu.memory_space<vmem>>, %arg2: memref<2x2xf32, #tpu.memory_space<vmem>>, %arg3: memref<1x2xf32, #tpu.memory_space<vmem>>, %arg4: memref<3x3x2xf32, #tpu.memory_space<vmem>>, %arg5: memref<2x2xf32, #tpu.memory_space<vmem>>, %arg6: memref<1x2xf32, #tpu.memory_space<vmem>>, %arg7: memref<1x16x16x4xf32, #tpu.memory_space<vmem>>, %arg8: memref<18x18x2xf32, #tpu.memory_space<vmem>>) attributes {dimension_semantics = [#tpu.dimension_semantics<parallel>], iteration_bounds = array<i64: 2>, scalar_prefetch = 0 : i64, scratch_operands = 1 : i64, tpu.core_type = #tpu.core_type<tc>, window_params = [{transform_indices = @transform_0, window_bounds = array<i64: 1, 16, 16, 4>}, {pipeline_mode = #tpu.pipeline_mode<synchronous>, transform_indices = @transform_1, window_bounds = array<i64: 2, 2>}, {pipeline_mode = #tpu.pipeline_mode<synchronous>, transform_indices = @transform_2, window_bounds = array<i64: 1, 2>}, {pipeline_mode = #tpu.pipeline_mode<synchronous>, transform_indices = @transform_3, window_bounds = array<i64: 3, 3, 2>}, {pipeline_mode = #tpu.pipeline_mode<synchronous>, transform_indices = @transform_4, window_bounds = array<i64: 2, 2>}, {pipeline_mode = #tpu.pipeline_mode<synchronous>, transform_indices = @transform_5, window_bounds = array<i64: 1, 2>}, {transform_indices = @transform_6, window_bounds = array<i64: 1, 16, 16, 4>}]} {
    %c0 = arith.constant 0 : index
    %c0_0 = arith.constant 0 : index
    %c0_1 = arith.constant 0 : index
    %c0_2 = arith.constant 0 : index
    %0 = vector.load %arg1[%c0, %c0_0, %c0_1, %c0_2] : memref<1x16x16x4xf32, #tpu.memory_space<vmem>>, vector<1x16x16x4xf32>
    %1 = vector.shape_cast %0 : vector<1x16x16x4xf32> to vector<16x16x4xf32>
    %2 = vector.extract_strided_slice %1 {offsets = [0, 0, 2], sizes = [16, 16, 2], strides = [1, 1, 1]} : vector<16x16x4xf32> to vector<16x16x2xf32>
    %3 = vector.shape_cast %2 : vector<16x16x2xf32> to vector<256x2xf32>
    %c0_3 = arith.constant 0 : index
    %c0_4 = arith.constant 0 : index
    %4 = vector.load %arg2[%c0_3, %c0_4] : memref<2x2xf32, #tpu.memory_space<vmem>>, vector<2x2xf32>
    %cst = arith.constant dense<0.000000e+00> : vector<256x2xf32>
    %5 = tpu.matmul %3, %4, %cst {dimension_numbers = #tpu.dot_dimension_numbers<[1], [0], [0], [1], [0, 0, 1, 1], [], []>} : vector<256x2xf32>, vector<2x2xf32>, vector<256x2xf32> -> vector<256x2xf32>
    %c0_5 = arith.constant 0 : index
    %c0_6 = arith.constant 0 : index
    %6 = vector.load %arg3[%c0_5, %c0_6] : memref<1x2xf32, #tpu.memory_space<vmem>>, vector<1x2xf32>
    %7 = vector.broadcast %6 : vector<1x2xf32> to vector<256x2xf32>
    %8 = arith.addf %5, %7 : vector<256x2xf32>
    %cst_7 = arith.constant 0.000000e+00 : f32
    %9 = vector.broadcast %cst_7 : f32 to vector<256x2xf32>
    %10 = arith.maximumf %8, %9 : vector<256x2xf32>
    %11 = vector.shape_cast %10 : vector<256x2xf32> to vector<16x16x2xf32>
    %cst_8 = arith.constant 0.000000e+00 : f32
    %12 = vector.broadcast %cst_8 : f32 to vector<18x18x2xf32>
    %c0_9 = arith.constant 0 : index
    %c0_10 = arith.constant 0 : index
    %c0_11 = arith.constant 0 : index
    %13 = vector.load %arg8[%c0_9, %c0_10, %c0_11] : memref<18x18x2xf32, #tpu.memory_space<vmem>>, vector<18x18x2xf32>
    tpu.vector_store %arg8[%c0_9, %c0_10, %c0_11], %12 {strides = array<i32>} : memref<18x18x2xf32, #tpu.memory_space<vmem>>, vector<18x18x2xf32>,
    %c1 = arith.constant 1 : index
    %c1_12 = arith.constant 1 : index
    %c0_13 = arith.constant 0 : index
    %14 = vector.load %arg8[%c1, %c1_12, %c0_13] : memref<18x18x2xf32, #tpu.memory_space<vmem>>, vector<16x16x2xf32>
    tpu.vector_store %arg8[%c1, %c1_12, %c0_13], %11 {strides = array<i32>} : memref<18x18x2xf32, #tpu.memory_space<vmem>>, vector<16x16x2xf32>,
    %cst_14 = arith.constant 0.000000e+00 : f32
    %15 = vector.broadcast %cst_14 : f32 to vector<16x16x2xf32>
    %c0_15 = arith.constant 0 : index
    %c0_16 = arith.constant 0 : index
    %c0_17 = arith.constant 0 : index
    %16 = vector.load %arg8[%c0_15, %c0_16, %c0_17] : memref<18x18x2xf32, #tpu.memory_space<vmem>>, vector<16x16x2xf32>
    %c0_18 = arith.constant 0 : index
    %c0_19 = arith.constant 0 : index
    %c0_20 = arith.constant 0 : index
    %17 = vector.load %arg4[%c0_18, %c0_19, %c0_20] : memref<3x3x2xf32, #tpu.memory_space<vmem>>, vector<1x1x2xf32>
    %18 = vector.shape_cast %17 : vector<1x1x2xf32> to vector<2xf32>
    %19 = vector.shape_cast %18 : vector<2xf32> to vector<1x1x2xf32>
    %20 = vector.broadcast %19 : vector<1x1x2xf32> to vector<16x16x2xf32>
    %21 = arith.mulf %16, %20 : vector<16x16x2xf32>
    %22 = arith.addf %15, %21 : vector<16x16x2xf32>
    %c0_21 = arith.constant 0 : index
    %c1_22 = arith.constant 1 : index
    %c0_23 = arith.constant 0 : index
    %23 = vector.load %arg8[%c0_21, %c1_22, %c0_23] : memref<18x18x2xf32, #tpu.memory_space<vmem>>, vector<16x16x2xf32>
    %c0_24 = arith.constant 0 : index
    %c1_25 = arith.constant 1 : index
    %c0_26 = arith.constant 0 : index
    %24 = vector.load %arg4[%c0_24, %c1_25, %c0_26] : memref<3x3x2xf32, #tpu.memory_space<vmem>>, vector<1x1x2xf32>
    %25 = vector.shape_cast %24 : vector<1x1x2xf32> to vector<2xf32>
    %26 = vector.shape_cast %25 : vector<2xf32> to vector<1x1x2xf32>
    %27 = vector.broadcast %26 : vector<1x1x2xf32> to vector<16x16x2xf32>
    %28 = arith.mulf %23, %27 : vector<16x16x2xf32>
    %29 = arith.addf %22, %28 : vector<16x16x2xf32>
    %c0_27 = arith.constant 0 : index
    %c2 = arith.constant 2 : index
    %c0_28 = arith.constant 0 : index
    %30 = vector.load %arg8[%c0_27, %c2, %c0_28] : memref<18x18x2xf32, #tpu.memory_space<vmem>>, vector<16x16x2xf32>
    %c0_29 = arith.constant 0 : index
    %c2_30 = arith.constant 2 : index
    %c0_31 = arith.constant 0 : index
    %31 = vector.load %arg4[%c0_29, %c2_30, %c0_31] : memref<3x3x2xf32, #tpu.memory_space<vmem>>, vector<1x1x2xf32>
    %32 = vector.shape_cast %31 : vector<1x1x2xf32> to vector<2xf32>
    %33 = vector.shape_cast %32 : vector<2xf32> to vector<1x1x2xf32>
    %34 = vector.broadcast %33 : vector<1x1x2xf32> to vector<16x16x2xf32>
    %35 = arith.mulf %30, %34 : vector<16x16x2xf32>
    %36 = arith.addf %29, %35 : vector<16x16x2xf32>
    %c1_32 = arith.constant 1 : index
    %c0_33 = arith.constant 0 : index
    %c0_34 = arith.constant 0 : index
    %37 = vector.load %arg8[%c1_32, %c0_33, %c0_34] : memref<18x18x2xf32, #tpu.memory_space<vmem>>, vector<16x16x2xf32>
    %c1_35 = arith.constant 1 : index
    %c0_36 = arith.constant 0 : index
    %c0_37 = arith.constant 0 : index
    %38 = vector.load %arg4[%c1_35, %c0_36, %c0_37] : memref<3x3x2xf32, #tpu.memory_space<vmem>>, vector<1x1x2xf32>
    %39 = vector.shape_cast %38 : vector<1x1x2xf32> to vector<2xf32>
    %40 = vector.shape_cast %39 : vector<2xf32> to vector<1x1x2xf32>
    %41 = vector.broadcast %40 : vector<1x1x2xf32> to vector<16x16x2xf32>
    %42 = arith.mulf %37, %41 : vector<16x16x2xf32>
    %43 = arith.addf %36, %42 : vector<16x16x2xf32>
    %c1_38 = arith.constant 1 : index
    %c1_39 = arith.constant 1 : index
    %c0_40 = arith.constant 0 : index
    %44 = vector.load %arg8[%c1_38, %c1_39, %c0_40] : memref<18x18x2xf32, #tpu.memory_space<vmem>>, vector<16x16x2xf32>
    %c1_41 = arith.constant 1 : index
    %c1_42 = arith.constant 1 : index
    %c0_43 = arith.constant 0 : index
    %45 = vector.load %arg4[%c1_41, %c1_42, %c0_43] : memref<3x3x2xf32, #tpu.memory_space<vmem>>, vector<1x1x2xf32>
    %46 = vector.shape_cast %45 : vector<1x1x2xf32> to vector<2xf32>
    %47 = vector.shape_cast %46 : vector<2xf32> to vector<1x1x2xf32>
    %48 = vector.broadcast %47 : vector<1x1x2xf32> to vector<16x16x2xf32>
    %49 = arith.mulf %44, %48 : vector<16x16x2xf32>
    %50 = arith.addf %43, %49 : vector<16x16x2xf32>
    %c1_44 = arith.constant 1 : index
    %c2_45 = arith.constant 2 : index
    %c0_46 = arith.constant 0 : index
    %51 = vector.load %arg8[%c1_44, %c2_45, %c0_46] : memref<18x18x2xf32, #tpu.memory_space<vmem>>, vector<16x16x2xf32>
    %c1_47 = arith.constant 1 : index
    %c2_48 = arith.constant 2 : index
    %c0_49 = arith.constant 0 : index
    %52 = vector.load %arg4[%c1_47, %c2_48, %c0_49] : memref<3x3x2xf32, #tpu.memory_space<vmem>>, vector<1x1x2xf32>
    %53 = vector.shape_cast %52 : vector<1x1x2xf32> to vector<2xf32>
    %54 = vector.shape_cast %53 : vector<2xf32> to vector<1x1x2xf32>
    %55 = vector.broadcast %54 : vector<1x1x2xf32> to vector<16x16x2xf32>
    %56 = arith.mulf %51, %55 : vector<16x16x2xf32>
    %57 = arith.addf %50, %56 : vector<16x16x2xf32>
    %c2_50 = arith.constant 2 : index
    %c0_51 = arith.constant 0 : index
    %c0_52 = arith.constant 0 : index
    %58 = vector.load %arg8[%c2_50, %c0_51, %c0_52] : memref<18x18x2xf32, #tpu.memory_space<vmem>>, vector<16x16x2xf32>
    %c2_53 = arith.constant 2 : index
    %c0_54 = arith.constant 0 : index
    %c0_55 = arith.constant 0 : index
    %59 = vector.load %arg4[%c2_53, %c0_54, %c0_55] : memref<3x3x2xf32, #tpu.memory_space<vmem>>, vector<1x1x2xf32>
    %60 = vector.shape_cast %59 : vector<1x1x2xf32> to vector<2xf32>
    %61 = vector.shape_cast %60 : vector<2xf32> to vector<1x1x2xf32>
    %62 = vector.broadcast %61 : vector<1x1x2xf32> to vector<16x16x2xf32>
    %63 = arith.mulf %58, %62 : vector<16x16x2xf32>
    %64 = arith.addf %57, %63 : vector<16x16x2xf32>
    %c2_56 = arith.constant 2 : index
    %c1_57 = arith.constant 1 : index
    %c0_58 = arith.constant 0 : index
    %65 = vector.load %arg8[%c2_56, %c1_57, %c0_58] : memref<18x18x2xf32, #tpu.memory_space<vmem>>, vector<16x16x2xf32>
    %c2_59 = arith.constant 2 : index
    %c1_60 = arith.constant 1 : index
    %c0_61 = arith.constant 0 : index
    %66 = vector.load %arg4[%c2_59, %c1_60, %c0_61] : memref<3x3x2xf32, #tpu.memory_space<vmem>>, vector<1x1x2xf32>
    %67 = vector.shape_cast %66 : vector<1x1x2xf32> to vector<2xf32>
    %68 = vector.shape_cast %67 : vector<2xf32> to vector<1x1x2xf32>
    %69 = vector.broadcast %68 : vector<1x1x2xf32> to vector<16x16x2xf32>
    %70 = arith.mulf %65, %69 : vector<16x16x2xf32>
    %71 = arith.addf %64, %70 : vector<16x16x2xf32>
    %c2_62 = arith.constant 2 : index
    %c2_63 = arith.constant 2 : index
    %c0_64 = arith.constant 0 : index
    %72 = vector.load %arg8[%c2_62, %c2_63, %c0_64] : memref<18x18x2xf32, #tpu.memory_space<vmem>>, vector<16x16x2xf32>
    %c2_65 = arith.constant 2 : index
    %c2_66 = arith.constant 2 : index
    %c0_67 = arith.constant 0 : index
    %73 = vector.load %arg4[%c2_65, %c2_66, %c0_67] : memref<3x3x2xf32, #tpu.memory_space<vmem>>, vector<1x1x2xf32>
    %74 = vector.shape_cast %73 : vector<1x1x2xf32> to vector<2xf32>
    %75 = vector.shape_cast %74 : vector<2xf32> to vector<1x1x2xf32>
    %76 = vector.broadcast %75 : vector<1x1x2xf32> to vector<16x16x2xf32>
    %77 = arith.mulf %72, %76 : vector<16x16x2xf32>
    %78 = arith.addf %71, %77 : vector<16x16x2xf32>
    %79 = vector.shape_cast %78 : vector<16x16x2xf32> to vector<256x2xf32>
    %c0_68 = arith.constant 0 : index
    %c0_69 = arith.constant 0 : index
    %80 = vector.load %arg5[%c0_68, %c0_69] : memref<2x2xf32, #tpu.memory_space<vmem>>, vector<2x2xf32>
    %cst_70 = arith.constant dense<0.000000e+00> : vector<256x2xf32>
    %81 = tpu.matmul %79, %80, %cst_70 {dimension_numbers = #tpu.dot_dimension_numbers<[1], [0], [0], [1], [0, 0, 1, 1], [], []>} : vector<256x2xf32>, vector<2x2xf32>, vector<256x2xf32> -> vector<256x2xf32>
    %c0_71 = arith.constant 0 : index
    %c0_72 = arith.constant 0 : index
    %82 = vector.load %arg6[%c0_71, %c0_72] : memref<1x2xf32, #tpu.memory_space<vmem>>, vector<1x2xf32>
    %83 = vector.broadcast %82 : vector<1x2xf32> to vector<256x2xf32>
    %84 = arith.addf %81, %83 : vector<256x2xf32>
    %cst_73 = arith.constant 0.000000e+00 : f32
    %85 = vector.broadcast %cst_73 : f32 to vector<256x2xf32>
    %86 = arith.maximumf %84, %85 : vector<256x2xf32>
    %87 = vector.shape_cast %86 : vector<256x2xf32> to vector<16x16x2xf32>
    %88 = vector.extract_strided_slice %1 {offsets = [0, 0, 0], sizes = [16, 16, 2], strides = [1, 1, 1]} : vector<16x16x4xf32> to vector<16x16x2xf32>
    %89 = vector.shape_cast %88 : vector<16x16x2xf32> to vector<1x16x16x2xf32>
    %c0_74 = arith.constant 0 : index
    %c0_75 = arith.constant 0 : index
    %c0_76 = arith.constant 0 : index
    %c0_77 = arith.constant 0 : index
    %90 = vector.load %arg7[%c0_74, %c0_75, %c0_76, %c0_77] : memref<1x16x16x4xf32, #tpu.memory_space<vmem>>, vector<1x16x16x2xf32>
    tpu.vector_store %arg7[%c0_74, %c0_75, %c0_76, %c0_77], %89 {strides = array<i32>} : memref<1x16x16x4xf32, #tpu.memory_space<vmem>>, vector<1x16x16x2xf32>,
    %91 = vector.shape_cast %87 : vector<16x16x2xf32> to vector<1x16x16x2xf32>
    %c0_78 = arith.constant 0 : index
    %c0_79 = arith.constant 0 : index
    %c0_80 = arith.constant 0 : index
    %c2_81 = arith.constant 2 : index
    %92 = vector.load %arg7[%c0_78, %c0_79, %c0_80, %c2_81] : memref<1x16x16x4xf32, #tpu.memory_space<vmem>>, vector<1x16x16x2xf32>
    tpu.vector_store %arg7[%c0_78, %c0_79, %c0_80, %c2_81], %91 {strides = array<i32>} : memref<1x16x16x4xf32, #tpu.memory_space<vmem>>, vector<1x16x16x2xf32>,
    return
  }
  func.func @transform_0(%arg0: i32) -> (i32, i32, i32, i32) {
    %c0_i32 = arith.constant 0 : i32
    %c0_i32_0 = arith.constant 0 : i32
    %c0_i32_1 = arith.constant 0 : i32
    %c0_i32_2 = arith.constant 0 : i32
    return %arg0, %c0_i32, %c0_i32_0, %c0_i32_1 : i32, i32, i32, i32
  }
  func.func @transform_1(%arg0: i32) -> (i32, i32) {
    %c0_i32 = arith.constant 0 : i32
    %c0_i32_0 = arith.constant 0 : i32
    %c0_i32_1 = arith.constant 0 : i32
    return %c0_i32, %c0_i32_0 : i32, i32
  }
  func.func @transform_2(%arg0: i32) -> (i32, i32) {
    %c0_i32 = arith.constant 0 : i32
    %c0_i32_0 = arith.constant 0 : i32
    %c0_i32_1 = arith.constant 0 : i32
    return %c0_i32, %c0_i32_0 : i32, i32
  }
  func.func @transform_3(%arg0: i32) -> (i32, i32, i32) {
    %c0_i32 = arith.constant 0 : i32
    %c0_i32_0 = arith.constant 0 : i32
    %c0_i32_1 = arith.constant 0 : i32
    %c0_i32_2 = arith.constant 0 : i32
    return %c0_i32, %c0_i32_0, %c0_i32_1 : i32, i32, i32
  }
  func.func @transform_4(%arg0: i32) -> (i32, i32) {
    %c0_i32 = arith.constant 0 : i32
    %c0_i32_0 = arith.constant 0 : i32
    %c0_i32_1 = arith.constant 0 : i32
    return %c0_i32, %c0_i32_0 : i32, i32
  }
  func.func @transform_5(%arg0: i32) -> (i32, i32) {
    %c0_i32 = arith.constant 0 : i32
    %c0_i32_0 = arith.constant 0 : i32
    %c0_i32_1 = arith.constant 0 : i32
    return %c0_i32, %c0_i32_0 : i32, i32
  }
  func.func @transform_6(%arg0: i32) -> (i32, i32, i32, i32) {
    %c0_i32 = arith.constant 0 : i32
    %c0_i32_0 = arith.constant 0 : i32
    %c0_i32_1 = arith.constant 0 : i32
    %c0_i32_2 = arith.constant 0 : i32
    return %arg0, %c0_i32, %c0_i32_0, %c0_i32_1 : i32, i32, i32, i32
  }
}

</mosaic_0001>

<llo_original>
// kernel: shuffle_block_forward.1
$region0: #{shuffle_block_forward.1}
  #allocation0 [shape = 'u32[]', space=smem, size = 0x4, offset = 0x4, fixed_abs, tag = 'smem constant byte address 0x4 - core index']
  #allocation1 [shape = 'u32[72,128]{1,0:T(1,128)}', space=vmem, size = 0x9000, scoped, tag = 'internal scratch']
  #allocation2 [shape = 'f32[18,18,2]{2,1,0:T(8,128)}', space=vmem, size = 0x36000, scoped, tag = 'scratch operand']
  %s0 = inlined_call_operand.vmem [shape: f32[2,16,16,4], index: 0, kind: input, shape index: {}]
  %s1 = inlined_call_operand.vmem [shape: f32[2,2], index: 1, kind: input, shape index: {}]
  %s2 = inlined_call_operand.vmem [shape: f32[1,2], index: 2, kind: input, shape index: {}]
  %s3 = inlined_call_operand.vmem [shape: f32[3,3,2], index: 3, kind: input, shape index: {}]
  %s4 = inlined_call_operand.vmem [shape: f32[2,2], index: 4, kind: input, shape index: {}]
  %s5 = inlined_call_operand.vmem [shape: f32[1,2], index: 5, kind: input, shape index: {}]
  %s6 = inlined_call_operand.vmem [shape: f32[2,16,16,4], index: 6, kind: output, shape index: {}]
  %s7 = sld [smem:[#allocation0]]
  $region57: #{shuffle_block_forward.1} parent=0
    _
  %s9 = ssub.s32 1, %s7
  %s10 = scalar_select 0, %s9, %s7
  loop: start=0, step=1, limit=4
  $region2: #{shuffle_block_forward.1} parent=0 // loop_pre_header
    _
  $region3: #{shuffle_block_forward.1} parent=0 // loop_header
    %s12 = sphi 0, %s16
    %p13 = scmp.ge.s32.totalorder %s12, 4
    %s22 = sphi 0, %s24
    %s25 = sphi 0, %s22
    %s26 = sphi 0, %s25
    %s42 = sphi 0, %s26
    %s46 = sphi 0, %s46
    %s48 = sphi 0, %s46
    %s49 = sphi 0, %s48
    %s63 = sphi 0, %s49
    %s67 = sphi 0, %s67
    %s69 = sphi 0, %s67
    %s70 = sphi 0, %s69
    %s84 = sphi 0, %s70
    %s88 = sphi 0, %s88
    %s90 = sphi 0, %s88
    %s91 = sphi 0, %s90
    %s105 = sphi 0, %s91
    %s109 = sphi 0, %s109
    %s111 = sphi 0, %s109
    %s112 = sphi 0, %s111
    %s126 = sphi 0, %s112
    %s130 = sphi 0, %s130
    %s132 = sphi 0, %s130
    %s133 = sphi 0, %s132
    %s147 = sphi 0, %s133
    %s153 = sphi 0, %s155
    %s156 = sphi 0, %s153
    %s157 = sphi 0, %s156
    %s173 = sphi 0, %s157
  $region4: #{shuffle_block_forward.1} parent=0 // loop_header_branch
    %15 = sbr.rel (%p13) target = $region8
  $region5: #{shuffle_block_forward.1} parent=0 // loop_body
    %s17 = ssub.s32 %s12, 1
    %s18 = ssub.s32 %s12, 2
    %s19 = sadd.s32 %s12, 1
    %s20 = ssub.s32 %s12, %s19
    %p21 = scmp.eq.s32.totalorder %s20, 0
    %s23 = sadd.s32 %s22, 1
    %s24 = scalar_select %p21, %s22, %s23
    %p27 = pneg %p21
    %p28 = scmp.eq.s32.totalorder %s12, 1
    %p29 = por %p27, %p28
    %p30 = scmp.ne.s32.totalorder %s22, %s25
    %p31 = scmp.eq.s32.totalorder %s12, 0
    %p32 = por %p30, %p31
    %p33 = scmp.ne.s32.totalorder %s22, %s25
    %p34 = scmp.eq.s32.totalorder %s17, 1
    %p35 = por %p33, %p34
    %p36 = scmp.ne.s32.totalorder %s25, %s26
    %p37 = scmp.eq.s32.totalorder %s17, 0
    %p38 = por %p36, %p37
    %p39 = scmp.ne.s32.totalorder %s25, %s26
    %p40 = scmp.eq.s32.totalorder %s18, 1
    %p41 = por %p39, %p40
    %p43 = scmp.ne.s32.totalorder %s26, %s42
    %p44 = scmp.eq.s32.totalorder %s18, 0
    %p45 = por %p43, %p44
    %s47 = sadd.s32 %s46, 1
    %p50 = scmp.eq.s32.totalorder %s12, 1
    %p51 = scmp.ne.s32.totalorder %s46, %s48
    %p52 = scmp.eq.s32.totalorder %s12, 0
    %p53 = por %p51, %p52
    %p54 = scmp.ne.s32.totalorder %s46, %s48
    %p55 = scmp.eq.s32.totalorder %s17, 1
    %p56 = por %p54, %p55
    %p57 = scmp.ne.s32.totalorder %s48, %s49
    %p58 = scmp.eq.s32.totalorder %s17, 0
    %p59 = por %p57, %p58
    %p60 = scmp.ne.s32.totalorder %s48, %s49
    %p61 = scmp.eq.s32.totalorder %s18, 1
    %p62 = por %p60, %p61
    %p64 = scmp.ne.s32.totalorder %s49, %s63
    %p65 = scmp.eq.s32.totalorder %s18, 0
    %p66 = por %p64, %p65
    %s68 = sadd.s32 %s67, 1
    %p71 = scmp.eq.s32.totalorder %s12, 1
    %p72 = scmp.ne.s32.totalorder %s67, %s69
    %p73 = scmp.eq.s32.totalorder %s12, 0
    %p74 = por %p72, %p73
    %p75 = scmp.ne.s32.totalorder %s67, %s69
    %p76 = scmp.eq.s32.totalorder %s17, 1
    %p77 = por %p75, %p76
    %p78 = scmp.ne.s32.totalorder %s69, %s70
    %p79 = scmp.eq.s32.totalorder %s17, 0
    %p80 = por %p78, %p79
    %p81 = scmp.ne.s32.totalorder %s69, %s70
    %p82 = scmp.eq.s32.totalorder %s18, 1
    %p83 = por %p81, %p82
    %p85 = scmp.ne.s32.totalorder %s70, %s84
    %p86 = scmp.eq.s32.totalorder %s18, 0
    %p87 = por %p85, %p86
    %s89 = sadd.s32 %s88, 1
    %p92 = scmp.eq.s32.totalorder %s12, 1
    %p93 = scmp.ne.s32.totalorder %s88, %s90
    %p94 = scmp.eq.s32.totalorder %s12, 0
    %p95 = por %p93, %p94
    %p96 = scmp.ne.s32.totalorder %s88, %s90
    %p97 = scmp.eq.s32.totalorder %s17, 1
    %p98 = por %p96, %p97
    %p99 = scmp.ne.s32.totalorder %s90, %s91
    %p100 = scmp.eq.s32.totalorder %s17, 0
    %p101 = por %p99, %p100
    %p102 = scmp.ne.s32.totalorder %s90, %s91
    %p103 = scmp.eq.s32.totalorder %s18, 1
    %p104 = por %p102, %p103
    %p106 = scmp.ne.s32.totalorder %s91, %s105
    %p107 = scmp.eq.s32.totalorder %s18, 0
    %p108 = por %p106, %p107
    %s110 = sadd.s32 %s109, 1
    %p113 = scmp.eq.s32.totalorder %s12, 1
    %p114 = scmp.ne.s32.totalorder %s109, %s111
    %p115 = scmp.eq.s32.totalorder %s12, 0
    %p116 = por %p114, %p115
    %p117 = scmp.ne.s32.totalorder %s109, %s111
    %p118 = scmp.eq.s32.totalorder %s17, 1
    %p119 = por %p117, %p118
    %p120 = scmp.ne.s32.totalorder %s111, %s112
    %p121 = scmp.eq.s32.totalorder %s17, 0
    %p122 = por %p120, %p121
    %p123 = scmp.ne.s32.totalorder %s111, %s112
    %p124 = scmp.eq.s32.totalorder %s18, 1
    %p125 = por %p123, %p124
    %p127 = scmp.ne.s32.totalorder %s112, %s126
    %p128 = scmp.eq.s32.totalorder %s18, 0
    %p129 = por %p127, %p128
    %s131 = sadd.s32 %s130, 1
    %p134 = scmp.eq.s32.totalorder %s12, 1
    %p135 = scmp.ne.s32.totalorder %s130, %s132
    %p136 = scmp.eq.s32.totalorder %s12, 0
    %p137 = por %p135, %p136
    %p138 = scmp.ne.s32.totalorder %s130, %s132
    %p139 = scmp.eq.s32.totalorder %s17, 1
    %p140 = por %p138, %p139
    %p141 = scmp.ne.s32.totalorder %s132, %s133
    %p142 = scmp.eq.s32.totalorder %s17, 0
    %p143 = por %p141, %p142
    %p144 = scmp.ne.s32.totalorder %s132, %s133
    %p145 = scmp.eq.s32.totalorder %s18, 1
    %p146 = por %p144, %p145
    %p148 = scmp.ne.s32.totalorder %s133, %s147
    %p149 = scmp.eq.s32.totalorder %s18, 0
    %p150 = por %p148, %p149
    %s151 = ssub.s32 %s12, %s19
    %p152 = scmp.eq.s32.totalorder %s151, 0
    %s154 = sadd.s32 %s153, 1
    %s155 = scalar_select %p152, %s153, %s154
    %p158 = pneg %p152
    %p159 = scmp.eq.s32.totalorder %s12, 1
    %p160 = por %p158, %p159
    %p161 = scmp.ne.s32.totalorder %s153, %s156
    %p162 = scmp.eq.s32.totalorder %s12, 0
    %p163 = por %p161, %p162
    %p164 = scmp.ne.s32.totalorder %s153, %s156
    %p165 = scmp.eq.s32.totalorder %s17, 1
    %p166 = por %p164, %p165
    %p167 = scmp.ne.s32.totalorder %s156, %s157
    %p168 = scmp.eq.s32.totalorder %s17, 0
    %p169 = por %p167, %p168
    %p170 = scmp.ne.s32.totalorder %s156, %s157
    %p171 = scmp.eq.s32.totalorder %s18, 1
    %p172 = por %p170, %p171
    %p174 = scmp.ne.s32.totalorder %s157, %s173
    %p175 = scmp.eq.s32.totalorder %s18, 0
    %p176 = por %p174, %p175
    %p177 = scmp.le.s32.totalorder 1, %s12
    %p178 = scmp.lt.s32.totalorder %s12, 3
    %p179 = pnand %p177, %p178
    %p180 = pneg %p179
    // Predicated region
    $region9: #{shuffle_block_forward.1} parent=5 // pred_check
      _
    $region10: #{shuffle_block_forward.1} parent=5 // pred_check_branch
      %182 = sbr.rel (%p179) target = $region12
    $region11: #{shuffle_block_forward.1} parent=5 // pred_region
      %s183 = ssub.s32 %s12, 1
      // Predicated region
      $region13: #{shuffle_block_forward.1} parent=11 // pred_check
        %p184 = pneg %p59
      $region14: #{shuffle_block_forward.1} parent=11 // pred_check_branch
        %186 = sbr.rel (%p184) target = $region16
      $region15: #{shuffle_block_forward.1} parent=11 // pred_region
        _
      $region16: #{shuffle_block_forward.1} parent=11 // pred_fallthru
        _
      // Predicated region
      $region17: #{shuffle_block_forward.1} parent=11 // pred_check
        %p187 = pneg %p80
      $region18: #{shuffle_block_forward.1} parent=11 // pred_check_branch
        %189 = sbr.rel (%p187) target = $region20
      $region19: #{shuffle_block_forward.1} parent=11 // pred_region
        _
      $region20: #{shuffle_block_forward.1} parent=11 // pred_fallthru
        _
      // Predicated region
      $region21: #{shuffle_block_forward.1} parent=11 // pred_check
        %p190 = pneg %p101
      $region22: #{shuffle_block_forward.1} parent=11 // pred_check_branch
        %192 = sbr.rel (%p190) target = $region24
      $region23: #{shuffle_block_forward.1} parent=11 // pred_region
        _
      $region24: #{shuffle_block_forward.1} parent=11 // pred_fallthru
        _
      // Predicated region
      $region25: #{shuffle_block_forward.1} parent=11 // pred_check
        %p193 = pneg %p122
      $region26: #{shuffle_block_forward.1} parent=11 // pred_check_branch
        %195 = sbr.rel (%p193) target = $region28
      $region27: #{shuffle_block_forward.1} parent=11 // pred_region
        _
      $region28: #{shuffle_block_forward.1} parent=11 // pred_fallthru
        _
      // Predicated region
      $region29: #{shuffle_block_forward.1} parent=11 // pred_check
        %p196 = pneg %p143
      $region30: #{shuffle_block_forward.1} parent=11 // pred_check_branch
        %198 = sbr.rel (%p196) target = $region32
      $region31: #{shuffle_block_forward.1} parent=11 // pred_region
        _
      $region32: #{shuffle_block_forward.1} parent=11 // pred_fallthru
        _
    $region12: #{shuffle_block_forward.1} parent=5 // pred_fallthru
      _
    %p199 = scmp.lt.s32.totalorder %s12, 2
    // Predicated region
    $region33: #{shuffle_block_forward.1} parent=5 // pred_check
      %p200 = pneg %p199
    $region34: #{shuffle_block_forward.1} parent=5 // pred_check_branch
      %202 = sbr.rel (%p200) target = $region36
    $region35: #{shuffle_block_forward.1} parent=5 // pred_region
      // Predicated region
      $region37: #{shuffle_block_forward.1} parent=35 // pred_check
        %p203 = pneg %p32
      $region38: #{shuffle_block_forward.1} parent=35 // pred_check_branch
        %205 = sbr.rel (%p203) target = $region40
      $region39: #{shuffle_block_forward.1} parent=35 // pred_region
        %p206 = scmp.lt.s32.totalorder %s12, 1
        %s207 = scalar_select %p206, %s12, 1
        %s208 = smul.addr %s207, 32
        %s209 = smul.addr %s208, 8
        %s210 = scalar_lea.vmem %s0, %s209
      $region40: #{shuffle_block_forward.1} parent=35 // pred_fallthru
        _
    $region36: #{shuffle_block_forward.1} parent=5 // pred_fallthru
      _
    %p211 = scmp.le.s32.totalorder 1, %s12
    %p212 = scmp.lt.s32.totalorder %s12, 3
    %p213 = pnand %p211, %p212
    %p214 = pneg %p213
    // Predicated region
    $region41: #{shuffle_block_forward.1} parent=5 // pred_check
      _
    $region42: #{shuffle_block_forward.1} parent=5 // pred_check_branch
      %216 = sbr.rel (%p213) target = $region44
    $region43: #{shuffle_block_forward.1} parent=5 // pred_region
      %s217 = ssub.s32 %s12, 1
      %p218 = scmp.lt.s32.totalorder %s17, 1
      %s219 = scalar_select %p218, %s17, 1
      %s220 = smul.addr %s219, 32
      %s221 = smul.addr %s220, 8
      %s222 = scalar_lea.vmem %s0, %s221
      %p223 = pneg %p38
      %p224 = pneg %p35
      %p225 = pneg %p59
      %p226 = pneg %p56
      %p227 = pneg %p80
      %p228 = pneg %p77
      %p229 = pneg %p101
      %p230 = pneg %p98
      %p231 = pneg %p122
      %p232 = pneg %p119
      %p233 = pneg %p143
      %p234 = pneg %p140
      %p235 = pneg %p169
      %p236 = pneg %p166
      %p237 = scmp.lt.s32.totalorder %s17, 1
      %s238 = scalar_select %p237, %s17, 1
      %s239 = smul.addr %s238, 32
      %s240 = smul.addr %s239, 8
      %s241 = scalar_lea.vmem %s6, %s240
      %p242 = scmp.lt.s32.totalorder %s17, 1
      %s243 = scalar_select %p242, %s17, 1
      %s244 = smul.addr %s243, 32
      %s245 = smul.addr %s244, 8
      %s246 = scalar_lea.vmem %s0, %s245
      %p247 = scmp.lt.s32.totalorder %s17, 1
      %s248 = scalar_select %p247, %s17, 1
      %s249 = smul.addr %s248, 32
      %s250 = smul.addr %s249, 8
      %s251 = scalar_lea.vmem %s6, %s250
      %v252 = vld [vmem:[%s246] sm:$0xff]
      %v253 = vld [vmem:[%s246 + $0x8] sm:$0xff]
      %v254 = vld [vmem:[%s246 + $0x10] sm:$0xff]
      %v255 = vld [vmem:[%s246 + $0x18] sm:$0xff]
      %v256 = vld [vmem:[%s246 + $0x20] sm:$0xff]
      %v257 = vld [vmem:[%s246 + $0x28] sm:$0xff]
      %v258 = vld [vmem:[%s246 + $0x30] sm:$0xff]
      %v259 = vld [vmem:[%s246 + $0x38] sm:$0xff]
      %v260 = vld [vmem:[%s246 + $0x40] sm:$0xff]
      %v261 = vld [vmem:[%s246 + $0x48] sm:$0xff]
      %v262 = vld [vmem:[%s246 + $0x50] sm:$0xff]
      %v263 = vld [vmem:[%s246 + $0x58] sm:$0xff]
      %v264 = vld [vmem:[%s246 + $0x60] sm:$0xff]
      %v265 = vld [vmem:[%s246 + $0x68] sm:$0xff]
      %v266 = vld [vmem:[%s246 + $0x70] sm:$0xff]
      %v267 = vld [vmem:[%s246 + $0x78] sm:$0xff]
      %v268 = vld [vmem:[%s246 + $0x80] sm:$0xff]
      %v269 = vld [vmem:[%s246 + $0x88] sm:$0xff]
      %v270 = vld [vmem:[%s246 + $0x90] sm:$0xff]
      %v271 = vld [vmem:[%s246 + $0x98] sm:$0xff]
      %v272 = vld [vmem:[%s246 + $0xa0] sm:$0xff]
      %v273 = vld [vmem:[%s246 + $0xa8] sm:$0xff]
      %v274 = vld [vmem:[%s246 + $0xb0] sm:$0xff]
      %v275 = vld [vmem:[%s246 + $0xb8] sm:$0xff]
      %v276 = vld [vmem:[%s246 + $0xc0] sm:$0xff]
      %v277 = vld [vmem:[%s246 + $0xc8] sm:$0xff]
      %v278 = vld [vmem:[%s246 + $0xd0] sm:$0xff]
      %v279 = vld [vmem:[%s246 + $0xd8] sm:$0xff]
      %v280 = vld [vmem:[%s246 + $0xe0] sm:$0xff]
      %v281 = vld [vmem:[%s246 + $0xe8] sm:$0xff]
      %v282 = vld [vmem:[%s246 + $0xf0] sm:$0xff]
      %v283 = vld [vmem:[%s246 + $0xf8] sm:$0xff]
      %v284 = vld [vmem:[%s1] sm:$0x3]
      %v285 = vld [vmem:[%s2] sm:$0x1]
      %v287 = vperm.slane %v285, 0
      %321 = vrot.lane.b32.xlu0 %v252, 126
      %v322 = vpop.permute.xlu0 %321
      %323 = vrot.lane.b32.xlu0 %v253, 126
      %v324 = vpop.permute.xlu0 %323
      %325 = vrot.lane.b32.xlu0 %v254, 126
      %v326 = vpop.permute.xlu0 %325
      %327 = vrot.lane.b32.xlu0 %v255, 126
      %v328 = vpop.permute.xlu0 %327
      %329 = vrot.lane.b32.xlu0 %v256, 126
      %v330 = vpop.permute.xlu0 %329
      %331 = vrot.lane.b32.xlu0 %v257, 126
      %v332 = vpop.permute.xlu0 %331
      %333 = vrot.lane.b32.xlu0 %v258, 126
      %v334 = vpop.permute.xlu0 %333
      %335 = vrot.lane.b32.xlu0 %v259, 126
      %v336 = vpop.permute.xlu0 %335
      %337 = vrot.lane.b32.xlu0 %v260, 126
      %v338 = vpop.permute.xlu0 %337
      %339 = vrot.lane.b32.xlu0 %v261, 126
      %v340 = vpop.permute.xlu0 %339
      %341 = vrot.lane.b32.xlu0 %v262, 126
      %v342 = vpop.permute.xlu0 %341
      %343 = vrot.lane.b32.xlu0 %v263, 126
      %v344 = vpop.permute.xlu0 %343
      %345 = vrot.lane.b32.xlu0 %v264, 126
      %v346 = vpop.permute.xlu0 %345
      %347 = vrot.lane.b32.xlu0 %v265, 126
      %v348 = vpop.permute.xlu0 %347
      %349 = vrot.lane.b32.xlu0 %v266, 126
      %v350 = vpop.permute.xlu0 %349
      %351 = vrot.lane.b32.xlu0 %v267, 126
      %v352 = vpop.permute.xlu0 %351
      %353 = vrot.lane.b32.xlu0 %v268, 126
      %v354 = vpop.permute.xlu0 %353
      %355 = vrot.lane.b32.xlu0 %v269, 126
      %v356 = vpop.permute.xlu0 %355
      %357 = vrot.lane.b32.xlu0 %v270, 126
      %v358 = vpop.permute.xlu0 %357
      %359 = vrot.lane.b32.xlu0 %v271, 126
      %v360 = vpop.permute.xlu0 %359
      %361 = vrot.lane.b32.xlu0 %v272, 126
      %v362 = vpop.permute.xlu0 %361
      %363 = vrot.lane.b32.xlu0 %v273, 126
      %v364 = vpop.permute.xlu0 %363
      %365 = vrot.lane.b32.xlu0 %v274, 126
      %v366 = vpop.permute.xlu0 %365
      %367 = vrot.lane.b32.xlu0 %v275, 126
      %v368 = vpop.permute.xlu0 %367
      %369 = vrot.lane.b32.xlu0 %v276, 126
      %v370 = vpop.permute.xlu0 %369
      %371 = vrot.lane.b32.xlu0 %v277, 126
      %v372 = vpop.permute.xlu0 %371
      %373 = vrot.lane.b32.xlu0 %v278, 126
      %v374 = vpop.permute.xlu0 %373
      %375 = vrot.lane.b32.xlu0 %v279, 126
      %v376 = vpop.permute.xlu0 %375
      %377 = vrot.lane.b32.xlu0 %v280, 126
      %v378 = vpop.permute.xlu0 %377
      %379 = vrot.lane.b32.xlu0 %v281, 126
      %v380 = vpop.permute.xlu0 %379
      %381 = vrot.lane.b32.xlu0 %v282, 126
      %v382 = vpop.permute.xlu0 %381
      %383 = vrot.lane.b32.xlu0 %v283, 126
      %v384 = vpop.permute.xlu0 %383
      %vm385 = vcmask 15360
      %v386 = vsel %vm385, %v322, 0
      %v388 = vsel %vm385, %v324, 0
      %v390 = vsel %vm385, %v326, 0
      %v392 = vsel %vm385, %v328, 0
      %v394 = vsel %vm385, %v330, 0
      %v396 = vsel %vm385, %v332, 0
      %v398 = vsel %vm385, %v334, 0
      %v400 = vsel %vm385, %v336, 0
      %v402 = vsel %vm385, %v338, 0
      %v404 = vsel %vm385, %v340, 0
      %v406 = vsel %vm385, %v342, 0
      %v408 = vsel %vm385, %v344, 0
      %v410 = vsel %vm385, %v346, 0
      %v412 = vsel %vm385, %v348, 0
      %v414 = vsel %vm385, %v350, 0
      %v416 = vsel %vm385, %v352, 0
      %v418 = vsel %vm385, %v354, 0
      %v420 = vsel %vm385, %v356, 0
      %v422 = vsel %vm385, %v358, 0
      %v424 = vsel %vm385, %v360, 0
      %v426 = vsel %vm385, %v362, 0
      %v428 = vsel %vm385, %v364, 0
      %v430 = vsel %vm385, %v366, 0
      %v432 = vsel %vm385, %v368, 0
      %v434 = vsel %vm385, %v370, 0
      %v436 = vsel %vm385, %v372, 0
      %v438 = vsel %vm385, %v374, 0
      %v440 = vsel %vm385, %v376, 0
      %v442 = vsel %vm385, %v378, 0
      %v444 = vsel %vm385, %v380, 0
      %v446 = vsel %vm385, %v382, 0
      %v448 = vsel %vm385, %v384, 0
      %vm450 = vcmask 1041408
      %v452 = vsel %vm450, %v284, 0
      %454 = vmatpush.msra.mxu0 0.0
      %455 = vmatpush.msra.mxu0 0.0
      %456 = vmatpush.msra.mxu0 0.0
      %457 = vmatpush.msra.mxu0 0.0
      %458 = vmatpush.msra.mxu0 0.0
      %459 = vmatpush.msra.mxu0 0.0
      %460 = vmatpush.msra.mxu0 0.0
      %461 = vmatpush.msra.mxu0 0.0
      %462 = vmatpush.msra.mxu0 0.0
      %463 = vmatpush.msra.mxu0 0.0
      %464 = vmatpush.msra.mxu0 0.0
      %465 = vmatpush.msra.mxu0 0.0
      %466 = vmatpush.msra.mxu0 0.0
      %467 = vmatpush.msra.mxu0 0.0
      %468 = vmatpush.msra.mxu0 0.0
      %469 = vmatpush.msra.mxu0 %v452
      %470 = vmatmul.f32.gmra.mxu0 %v386
      %v471 = vpop.f32.mrf.mxu0
      %v472 = vadd.f32 %v287, %v471
      %473 = vmatmul.f32.gmra.mxu0 %v388
      %v474 = vpop.f32.mrf.mxu0
      %v475 = vadd.f32 %v287, %v474
      %476 = vmatmul.f32.gmra.mxu0 %v390
      %v477 = vpop.f32.mrf.mxu0
      %v478 = vadd.f32 %v287, %v477
      %479 = vmatmul.f32.gmra.mxu0 %v392
      %v480 = vpop.f32.mrf.mxu0
      %v481 = vadd.f32 %v287, %v480
      %482 = vmatmul.f32.gmra.mxu0 %v394
      %v483 = vpop.f32.mrf.mxu0
      %v484 = vadd.f32 %v287, %v483
      %485 = vmatmul.f32.gmra.mxu0 %v396
      %v486 = vpop.f32.mrf.mxu0
      %v487 = vadd.f32 %v287, %v486
      %488 = vmatmul.f32.gmra.mxu0 %v398
      %v489 = vpop.f32.mrf.mxu0
      %v490 = vadd.f32 %v287, %v489
      %491 = vmatmul.f32.gmra.mxu0 %v400
      %v492 = vpop.f32.mrf.mxu0
      %v493 = vadd.f32 %v287, %v492
      %494 = vmatmul.f32.gmra.mxu0 %v402
      %v495 = vpop.f32.mrf.mxu0
      %v496 = vadd.f32 %v287, %v495
      %497 = vmatmul.f32.gmra.mxu0 %v404
      %v498 = vpop.f32.mrf.mxu0
      %v499 = vadd.f32 %v287, %v498
      %500 = vmatmul.f32.gmra.mxu0 %v406
      %v501 = vpop.f32.mrf.mxu0
      %v502 = vadd.f32 %v287, %v501
      %503 = vmatmul.f32.gmra.mxu0 %v408
      %v504 = vpop.f32.mrf.mxu0
      %v505 = vadd.f32 %v287, %v504
      %506 = vmatmul.f32.gmra.mxu0 %v410
      %v507 = vpop.f32.mrf.mxu0
      %v508 = vadd.f32 %v287, %v507
      %509 = vmatmul.f32.gmra.mxu0 %v412
      %v510 = vpop.f32.mrf.mxu0
      %v511 = vadd.f32 %v287, %v510
      %512 = vmatmul.f32.gmra.mxu0 %v414
      %v513 = vpop.f32.mrf.mxu0
      %v514 = vadd.f32 %v287, %v513
      %515 = vmatmul.f32.gmra.mxu0 %v416
      %v516 = vpop.f32.mrf.mxu0
      %v517 = vadd.f32 %v287, %v516
      %518 = vmatmul.f32.gmra.mxu0 %v418
      %v519 = vpop.f32.mrf.mxu0
      %v520 = vadd.f32 %v287, %v519
      %521 = vmatmul.f32.gmra.mxu0 %v420
      %v522 = vpop.f32.mrf.mxu0
      %v523 = vadd.f32 %v287, %v522
      %524 = vmatmul.f32.gmra.mxu0 %v422
      %v525 = vpop.f32.mrf.mxu0
      %v526 = vadd.f32 %v287, %v525
      %527 = vmatmul.f32.gmra.mxu0 %v424
      %v528 = vpop.f32.mrf.mxu0
      %v529 = vadd.f32 %v287, %v528
      %530 = vmatmul.f32.gmra.mxu0 %v426
      %v531 = vpop.f32.mrf.mxu0
      %v532 = vadd.f32 %v287, %v531
      %533 = vmatmul.f32.gmra.mxu0 %v428
      %v534 = vpop.f32.mrf.mxu0
      %v535 = vadd.f32 %v287, %v534
      %536 = vmatmul.f32.gmra.mxu0 %v430
      %v537 = vpop.f32.mrf.mxu0
      %v538 = vadd.f32 %v287, %v537
      %539 = vmatmul.f32.gmra.mxu0 %v432
      %v540 = vpop.f32.mrf.mxu0
      %v541 = vadd.f32 %v287, %v540
      %542 = vmatmul.f32.gmra.mxu0 %v434
      %v543 = vpop.f32.mrf.mxu0
      %v544 = vadd.f32 %v287, %v543
      %545 = vmatmul.f32.gmra.mxu0 %v436
      %v546 = vpop.f32.mrf.mxu0
      %v547 = vadd.f32 %v287, %v546
      %548 = vmatmul.f32.gmra.mxu0 %v438
      %v549 = vpop.f32.mrf.mxu0
      %v550 = vadd.f32 %v287, %v549
      %551 = vmatmul.f32.gmra.mxu0 %v440
      %v552 = vpop.f32.mrf.mxu0
      %v553 = vadd.f32 %v287, %v552
      %554 = vmatmul.f32.gmra.mxu0 %v442
      %v555 = vpop.f32.mrf.mxu0
      %v556 = vadd.f32 %v287, %v555
      %557 = vmatmul.f32.gmra.mxu0 %v444
      %v558 = vpop.f32.mrf.mxu0
      %v559 = vadd.f32 %v287, %v558
      %560 = vmatmul.f32.gmra.mxu0 %v446
      %v561 = vpop.f32.mrf.mxu0
      %v562 = vadd.f32 %v287, %v561
      %563 = vmatmul.f32.gmra.mxu0 %v448
      %v564 = vpop.f32.mrf.mxu0
      %v565 = vadd.f32 %v287, %v564
      %566 = vdwg.mxu0
      %v567 = vmax.f32 %v472, 0.0
      %v568 = vmax.f32 %v475, 0.0
      %v569 = vmax.f32 %v478, 0.0
      %v570 = vmax.f32 %v481, 0.0
      %v571 = vmax.f32 %v484, 0.0
      %v572 = vmax.f32 %v487, 0.0
      %v573 = vmax.f32 %v490, 0.0
      %v574 = vmax.f32 %v493, 0.0
      %v575 = vmax.f32 %v496, 0.0
      %v576 = vmax.f32 %v499, 0.0
      %v577 = vmax.f32 %v502, 0.0
      %v578 = vmax.f32 %v505, 0.0
      %v579 = vmax.f32 %v508, 0.0
      %v580 = vmax.f32 %v511, 0.0
      %v581 = vmax.f32 %v514, 0.0
      %v582 = vmax.f32 %v517, 0.0
      %v583 = vmax.f32 %v520, 0.0
      %v584 = vmax.f32 %v523, 0.0
      %v585 = vmax.f32 %v526, 0.0
      %v586 = vmax.f32 %v529, 0.0
      %v587 = vmax.f32 %v532, 0.0
      %v588 = vmax.f32 %v535, 0.0
      %v589 = vmax.f32 %v538, 0.0
      %v590 = vmax.f32 %v541, 0.0
      %v591 = vmax.f32 %v544, 0.0
      %v592 = vmax.f32 %v547, 0.0
      %v593 = vmax.f32 %v550, 0.0
      %v594 = vmax.f32 %v553, 0.0
      %v595 = vmax.f32 %v556, 0.0
      %v596 = vmax.f32 %v559, 0.0
      %v597 = vmax.f32 %v562, 0.0
      %v598 = vmax.f32 %v565, 0.0
      %599 = vst.msk [vmem:[#allocation2] sm:$0xff] %vm385, 0.0
      %600 = vst.msk [vmem:[#allocation2 + $0x8] sm:$0xff] %vm385, 0.0
      %vm601 = vcmask 9216
      %602 = vst.msk [vmem:[#allocation2 + $0x10] sm:$0x3] %vm601, 0.0
      %603 = vst.msk [vmem:[#allocation2 + $0x18] sm:$0xff] %vm385, 0.0
      %604 = vst.msk [vmem:[#allocation2 + $0x20] sm:$0xff] %vm385, 0.0
      %605 = vst.msk [vmem:[#allocation2 + $0x28] sm:$0x3] %vm601, 0.0
      %606 = vst.msk [vmem:[#allocation2 + $0x30] sm:$0xff] %vm385, 0.0
      %607 = vst.msk [vmem:[#allocation2 + $0x38] sm:$0xff] %vm385, 0.0
      %608 = vst.msk [vmem:[#allocation2 + $0x40] sm:$0x3] %vm601, 0.0
      %609 = vst.msk [vmem:[#allocation2 + $0x48] sm:$0xff] %vm385, 0.0
      %610 = vst.msk [vmem:[#allocation2 + $0x50] sm:$0xff] %vm385, 0.0
      %611 = vst.msk [vmem:[#allocation2 + $0x58] sm:$0x3] %vm601, 0.0
      %612 = vst.msk [vmem:[#allocation2 + $0x60] sm:$0xff] %vm385, 0.0
      %613 = vst.msk [vmem:[#allocation2 + $0x68] sm:$0xff] %vm385, 0.0
      %614 = vst.msk [vmem:[#allocation2 + $0x70] sm:$0x3] %vm601, 0.0
      %615 = vst.msk [vmem:[#allocation2 + $0x78] sm:$0xff] %vm385, 0.0
      %616 = vst.msk [vmem:[#allocation2 + $0x80] sm:$0xff] %vm385, 0.0
      %617 = vst.msk [vmem:[#allocation2 + $0x88] sm:$0x3] %vm601, 0.0
      %618 = vst.msk [vmem:[#allocation2 + $0x90] sm:$0xff] %vm385, 0.0
      %619 = vst.msk [vmem:[#allocation2 + $0x98] sm:$0xff] %vm385, 0.0
      %620 = vst.msk [vmem:[#allocation2 + $0xa0] sm:$0x3] %vm601, 0.0
      %621 = vst.msk [vmem:[#allocation2 + $0xa8] sm:$0xff] %vm385, 0.0
      %622 = vst.msk [vmem:[#allocation2 + $0xb0] sm:$0xff] %vm385, 0.0
      %623 = vst.msk [vmem:[#allocation2 + $0xb8] sm:$0x3] %vm601, 0.0
      %624 = vst.msk [vmem:[#allocation2 + $0xc0] sm:$0xff] %vm385, 0.0
      %625 = vst.msk [vmem:[#allocation2 + $0xc8] sm:$0xff] %vm385, 0.0
      %626 = vst.msk [vmem:[#allocation2 + $0xd0] sm:$0x3] %vm601, 0.0
      %627 = vst.msk [vmem:[#allocation2 + $0xd8] sm:$0xff] %vm385, 0.0
      %628 = vst.msk [vmem:[#allocation2 + $0xe0] sm:$0xff] %vm385, 0.0
      %629 = vst.msk [vmem:[#allocation2 + $0xe8] sm:$0x3] %vm601, 0.0
      %630 = vst.msk [vmem:[#allocation2 + $0xf0] sm:$0xff] %vm385, 0.0
      %631 = vst.msk [vmem:[#allocation2 + $0xf8] sm:$0xff] %vm385, 0.0
      %632 = vst.msk [vmem:[#allocation2 + $0x100] sm:$0x3] %vm601, 0.0
      %633 = vst.msk [vmem:[#allocation2 + $0x108] sm:$0xff] %vm385, 0.0
      %634 = vst.msk [vmem:[#allocation2 + $0x110] sm:$0xff] %vm385, 0.0
      %635 = vst.msk [vmem:[#allocation2 + $0x118] sm:$0x3] %vm601, 0.0
      %636 = vst.msk [vmem:[#allocation2 + $0x120] sm:$0xff] %vm385, 0.0
      %637 = vst.msk [vmem:[#allocation2 + $0x128] sm:$0xff] %vm385, 0.0
      %638 = vst.msk [vmem:[#allocation2 + $0x130] sm:$0x3] %vm601, 0.0
      %639 = vst.msk [vmem:[#allocation2 + $0x138] sm:$0xff] %vm385, 0.0
      %640 = vst.msk [vmem:[#allocation2 + $0x140] sm:$0xff] %vm385, 0.0
      %641 = vst.msk [vmem:[#allocation2 + $0x148] sm:$0x3] %vm601, 0.0
      %642 = vst.msk [vmem:[#allocation2 + $0x150] sm:$0xff] %vm385, 0.0
      %643 = vst.msk [vmem:[#allocation2 + $0x158] sm:$0xff] %vm385, 0.0
      %644 = vst.msk [vmem:[#allocation2 + $0x160] sm:$0x3] %vm601, 0.0
      %645 = vst.msk [vmem:[#allocation2 + $0x168] sm:$0xff] %vm385, 0.0
      %646 = vst.msk [vmem:[#allocation2 + $0x170] sm:$0xff] %vm385, 0.0
      %647 = vst.msk [vmem:[#allocation2 + $0x178] sm:$0x3] %vm601, 0.0
      %648 = vst.msk [vmem:[#allocation2 + $0x180] sm:$0xff] %vm385, 0.0
      %649 = vst.msk [vmem:[#allocation2 + $0x188] sm:$0xff] %vm385, 0.0
      %650 = vst.msk [vmem:[#allocation2 + $0x190] sm:$0x3] %vm601, 0.0
      %651 = vst.msk [vmem:[#allocation2 + $0x198] sm:$0xff] %vm385, 0.0
      %652 = vst.msk [vmem:[#allocation2 + $0x1a0] sm:$0xff] %vm385, 0.0
      %653 = vst.msk [vmem:[#allocation2 + $0x1a8] sm:$0x3] %vm601, 0.0
      %s654 = scalar_lea.vmem [#allocation2], 24
      %655 = vst.msk [vmem:[%s654 + $0x1] sm:$0xff] %vm385, %v567
      %656 = vst.msk [vmem:[%s654 + $0x9] sm:$0xff] %vm385, %v568
      %657 = vst.msk [vmem:[%s654 + $0x19] sm:$0xff] %vm385, %v569
      %658 = vst.msk [vmem:[%s654 + $0x21] sm:$0xff] %vm385, %v570
      %659 = vst.msk [vmem:[%s654 + $0x31] sm:$0xff] %vm385, %v571
      %660 = vst.msk [vmem:[%s654 + $0x39] sm:$0xff] %vm385, %v572
      %661 = vst.msk [vmem:[%s654 + $0x49] sm:$0xff] %vm385, %v573
      %662 = vst.msk [vmem:[%s654 + $0x51] sm:$0xff] %vm385, %v574
      %663 = vst.msk [vmem:[%s654 + $0x61] sm:$0xff] %vm385, %v575
      %664 = vst.msk [vmem:[%s654 + $0x69] sm:$0xff] %vm385, %v576
      %665 = vst.msk [vmem:[%s654 + $0x79] sm:$0xff] %vm385, %v577
      %666 = vst.msk [vmem:[%s654 + $0x81] sm:$0xff] %vm385, %v578
      %667 = vst.msk [vmem:[%s654 + $0x91] sm:$0xff] %vm385, %v579
      %668 = vst.msk [vmem:[%s654 + $0x99] sm:$0xff] %vm385, %v580
      %669 = vst.msk [vmem:[%s654 + $0xa9] sm:$0xff] %vm385, %v581
      %670 = vst.msk [vmem:[%s654 + $0xb1] sm:$0xff] %vm385, %v582
      %671 = vst.msk [vmem:[%s654 + $0xc1] sm:$0xff] %vm385, %v583
      %672 = vst.msk [vmem:[%s654 + $0xc9] sm:$0xff] %vm385, %v584
      %673 = vst.msk [vmem:[%s654 + $0xd9] sm:$0xff] %vm385, %v585
      %674 = vst.msk [vmem:[%s654 + $0xe1] sm:$0xff] %vm385, %v586
      %675 = vst.msk [vmem:[%s654 + $0xf1] sm:$0xff] %vm385, %v587
      %676 = vst.msk [vmem:[%s654 + $0xf9] sm:$0xff] %vm385, %v588
      %677 = vst.msk [vmem:[%s654 + $0x109] sm:$0xff] %vm385, %v589
      %678 = vst.msk [vmem:[%s654 + $0x111] sm:$0xff] %vm385, %v590
      %679 = vst.msk [vmem:[%s654 + $0x121] sm:$0xff] %vm385, %v591
      %680 = vst.msk [vmem:[%s654 + $0x129] sm:$0xff] %vm385, %v592
      %681 = vst.msk [vmem:[%s654 + $0x139] sm:$0xff] %vm385, %v593
      %682 = vst.msk [vmem:[%s654 + $0x141] sm:$0xff] %vm385, %v594
      %683 = vst.msk [vmem:[%s654 + $0x151] sm:$0xff] %vm385, %v595
      %684 = vst.msk [vmem:[%s654 + $0x159] sm:$0xff] %vm385, %v596
      %685 = vst.msk [vmem:[%s654 + $0x169] sm:$0xff] %vm385, %v597
      %686 = vst.msk [vmem:[%s654 + $0x171] sm:$0xff] %vm385, %v598
      %v687 = vld [vmem:[#allocation2] sm:$0xff]
      %v688 = vld [vmem:[#allocation2 + $0x8] sm:$0xff]
      %v689 = vld [vmem:[#allocation2 + $0x18] sm:$0xff]
      %v690 = vld [vmem:[#allocation2 + $0x20] sm:$0xff]
      %v691 = vld [vmem:[#allocation2 + $0x30] sm:$0xff]
      %v692 = vld [vmem:[#allocation2 + $0x38] sm:$0xff]
      %v693 = vld [vmem:[#allocation2 + $0x48] sm:$0xff]
      %v694 = vld [vmem:[#allocation2 + $0x50] sm:$0xff]
      %v695 = vld [vmem:[#allocation2 + $0x60] sm:$0xff]
      %v696 = vld [vmem:[#allocation2 + $0x68] sm:$0xff]
      %v697 = vld [vmem:[#allocation2 + $0x78] sm:$0xff]
      %v698 = vld [vmem:[#allocation2 + $0x80] sm:$0xff]
      %v699 = vld [vmem:[#allocation2 + $0x90] sm:$0xff]
      %v700 = vld [vmem:[#allocation2 + $0x98] sm:$0xff]
      %v701 = vld [vmem:[#allocation2 + $0xa8] sm:$0xff]
      %v702 = vld [vmem:[#allocation2 + $0xb0] sm:$0xff]
      %v703 = vld [vmem:[#allocation2 + $0xc0] sm:$0xff]
      %v704 = vld [vmem:[#allocation2 + $0xc8] sm:$0xff]
      %v705 = vld [vmem:[#allocation2 + $0xd8] sm:$0xff]
      %v706 = vld [vmem:[#allocation2 + $0xe0] sm:$0xff]
      %v707 = vld [vmem:[#allocation2 + $0xf0] sm:$0xff]
      %v708 = vld [vmem:[#allocation2 + $0xf8] sm:$0xff]
      %v709 = vld [vmem:[#allocation2 + $0x108] sm:$0xff]
      %v710 = vld [vmem:[#allocation2 + $0x110] sm:$0xff]
      %v711 = vld [vmem:[#allocation2 + $0x120] sm:$0xff]
      %v712 = vld [vmem:[#allocation2 + $0x128] sm:$0xff]
      %v713 = vld [vmem:[#allocation2 + $0x138] sm:$0xff]
      %v714 = vld [vmem:[#allocation2 + $0x140] sm:$0xff]
      %v715 = vld [vmem:[#allocation2 + $0x150] sm:$0xff]
      %v716 = vld [vmem:[#allocation2 + $0x158] sm:$0xff]
      %v717 = vld [vmem:[#allocation2 + $0x168] sm:$0xff]
      %v718 = vld [vmem:[#allocation2 + $0x170] sm:$0xff]
      %v719 = vld [vmem:[%s3] sm:$0x1]
      %v720 = vperm.slane %v719, 0
      %v721 = vmul.f32 %v687, %v720
      %v722 = vmul.f32 %v688, %v720
      %v723 = vmul.f32 %v689, %v720
      %v724 = vmul.f32 %v690, %v720
      %v725 = vmul.f32 %v691, %v720
      %v726 = vmul.f32 %v692, %v720
      %v727 = vmul.f32 %v693, %v720
      %v728 = vmul.f32 %v694, %v720
      %v729 = vmul.f32 %v695, %v720
      %v730 = vmul.f32 %v696, %v720
      %v731 = vmul.f32 %v697, %v720
      %v732 = vmul.f32 %v698, %v720
      %v733 = vmul.f32 %v699, %v720
      %v734 = vmul.f32 %v700, %v720
      %v735 = vmul.f32 %v701, %v720
      %v736 = vmul.f32 %v702, %v720
      %v737 = vmul.f32 %v703, %v720
      %v738 = vmul.f32 %v704, %v720
      %v739 = vmul.f32 %v705, %v720
      %v740 = vmul.f32 %v706, %v720
      %v741 = vmul.f32 %v707, %v720
      %v742 = vmul.f32 %v708, %v720
      %v743 = vmul.f32 %v709, %v720
      %v744 = vmul.f32 %v710, %v720
      %v745 = vmul.f32 %v711, %v720
      %v746 = vmul.f32 %v712, %v720
      %v747 = vmul.f32 %v713, %v720
      %v748 = vmul.f32 %v714, %v720
      %v749 = vmul.f32 %v715, %v720
      %v750 = vmul.f32 %v716, %v720
      %v751 = vmul.f32 %v717, %v720
      %v752 = vmul.f32 %v718, %v720
      %v753 = vadd.f32 %v721, 0.0
      %v754 = vadd.f32 %v722, 0.0
      %v755 = vadd.f32 %v723, 0.0
      %v756 = vadd.f32 %v724, 0.0
      %v757 = vadd.f32 %v725, 0.0
      %v758 = vadd.f32 %v726, 0.0
      %v759 = vadd.f32 %v727, 0.0
      %v760 = vadd.f32 %v728, 0.0
      %v761 = vadd.f32 %v729, 0.0
      %v762 = vadd.f32 %v730, 0.0
      %v763 = vadd.f32 %v731, 0.0
      %v764 = vadd.f32 %v732, 0.0
      %v765 = vadd.f32 %v733, 0.0
      %v766 = vadd.f32 %v734, 0.0
      %v767 = vadd.f32 %v735, 0.0
      %v768 = vadd.f32 %v736, 0.0
      %v769 = vadd.f32 %v737, 0.0
      %v770 = vadd.f32 %v738, 0.0
      %v771 = vadd.f32 %v739, 0.0
      %v772 = vadd.f32 %v740, 0.0
      %v773 = vadd.f32 %v741, 0.0
      %v774 = vadd.f32 %v742, 0.0
      %v775 = vadd.f32 %v743, 0.0
      %v776 = vadd.f32 %v744, 0.0
      %v777 = vadd.f32 %v745, 0.0
      %v778 = vadd.f32 %v746, 0.0
      %v779 = vadd.f32 %v747, 0.0
      %v780 = vadd.f32 %v748, 0.0
      %v781 = vadd.f32 %v749, 0.0
      %v782 = vadd.f32 %v750, 0.0
      %v783 = vadd.f32 %v751, 0.0
      %v784 = vadd.f32 %v752, 0.0
      %v785 = vld [vmem:[#allocation2 + $0x1] sm:$0xff]
      %v786 = vld [vmem:[#allocation2 + $0x9] sm:$0xff]
      %v787 = vld [vmem:[#allocation2 + $0x19] sm:$0xff]
      %v788 = vld [vmem:[#allocation2 + $0x21] sm:$0xff]
      %v789 = vld [vmem:[#allocation2 + $0x31] sm:$0xff]
      %v790 = vld [vmem:[#allocation2 + $0x39] sm:$0xff]
      %v791 = vld [vmem:[#allocation2 + $0x49] sm:$0xff]
      %v792 = vld [vmem:[#allocation2 + $0x51] sm:$0xff]
      %v793 = vld [vmem:[#allocation2 + $0x61] sm:$0xff]
      %v794 = vld [vmem:[#allocation2 + $0x69] sm:$0xff]
      %v795 = vld [vmem:[#allocation2 + $0x79] sm:$0xff]
      %v796 = vld [vmem:[#allocation2 + $0x81] sm:$0xff]
      %v797 = vld [vmem:[#allocation2 + $0x91] sm:$0xff]
      %v798 = vld [vmem:[#allocation2 + $0x99] sm:$0xff]
      %v799 = vld [vmem:[#allocation2 + $0xa9] sm:$0xff]
      %v800 = vld [vmem:[#allocation2 + $0xb1] sm:$0xff]
      %v801 = vld [vmem:[#allocation2 + $0xc1] sm:$0xff]
      %v802 = vld [vmem:[#allocation2 + $0xc9] sm:$0xff]
      %v803 = vld [vmem:[#allocation2 + $0xd9] sm:$0xff]
      %v804 = vld [vmem:[#allocation2 + $0xe1] sm:$0xff]
      %v805 = vld [vmem:[#allocation2 + $0xf1] sm:$0xff]
      %v806 = vld [vmem:[#allocation2 + $0xf9] sm:$0xff]
      %v807 = vld [vmem:[#allocation2 + $0x109] sm:$0xff]
      %v808 = vld [vmem:[#allocation2 + $0x111] sm:$0xff]
      %v809 = vld [vmem:[#allocation2 + $0x121] sm:$0xff]
      %v810 = vld [vmem:[#allocation2 + $0x129] sm:$0xff]
      %v811 = vld [vmem:[#allocation2 + $0x139] sm:$0xff]
      %v812 = vld [vmem:[#allocation2 + $0x141] sm:$0xff]
      %v813 = vld [vmem:[#allocation2 + $0x151] sm:$0xff]
      %v814 = vld [vmem:[#allocation2 + $0x159] sm:$0xff]
      %v815 = vld [vmem:[#allocation2 + $0x169] sm:$0xff]
      %v816 = vld [vmem:[#allocation2 + $0x171] sm:$0xff]
      %v817 = vld [vmem:[%s3 + $0x1] sm:$0x1]
      %v818 = vperm.slane %v817, 0
      %v819 = vmul.f32 %v785, %v818
      %v820 = vmul.f32 %v786, %v818
      %v821 = vmul.f32 %v787, %v818
      %v822 = vmul.f32 %v788, %v818
      %v823 = vmul.f32 %v789, %v818
      %v824 = vmul.f32 %v790, %v818
      %v825 = vmul.f32 %v791, %v818
      %v826 = vmul.f32 %v792, %v818
      %v827 = vmul.f32 %v793, %v818
      %v828 = vmul.f32 %v794, %v818
      %v829 = vmul.f32 %v795, %v818
      %v830 = vmul.f32 %v796, %v818
      %v831 = vmul.f32 %v797, %v818
      %v832 = vmul.f32 %v798, %v818
      %v833 = vmul.f32 %v799, %v818
      %v834 = vmul.f32 %v800, %v818
      %v835 = vmul.f32 %v801, %v818
      %v836 = vmul.f32 %v802, %v818
      %v837 = vmul.f32 %v803, %v818
      %v838 = vmul.f32 %v804, %v818
      %v839 = vmul.f32 %v805, %v818
      %v840 = vmul.f32 %v806, %v818
      %v841 = vmul.f32 %v807, %v818
      %v842 = vmul.f32 %v808, %v818
      %v843 = vmul.f32 %v809, %v818
      %v844 = vmul.f32 %v810, %v818
      %v845 = vmul.f32 %v811, %v818
      %v846 = vmul.f32 %v812, %v818
      %v847 = vmul.f32 %v813, %v818
      %v848 = vmul.f32 %v814, %v818
      %v849 = vmul.f32 %v815, %v818
      %v850 = vmul.f32 %v816, %v818
      %v851 = vadd.f32 %v753, %v819
      %v852 = vadd.f32 %v754, %v820
      %v853 = vadd.f32 %v755, %v821
      %v854 = vadd.f32 %v756, %v822
      %v855 = vadd.f32 %v757, %v823
      %v856 = vadd.f32 %v758, %v824
      %v857 = vadd.f32 %v759, %v825
      %v858 = vadd.f32 %v760, %v826
      %v859 = vadd.f32 %v761, %v827
      %v860 = vadd.f32 %v762, %v828
      %v861 = vadd.f32 %v763, %v829
      %v862 = vadd.f32 %v764, %v830
      %v863 = vadd.f32 %v765, %v831
      %v864 = vadd.f32 %v766, %v832
      %v865 = vadd.f32 %v767, %v833
      %v866 = vadd.f32 %v768, %v834
      %v867 = vadd.f32 %v769, %v835
      %v868 = vadd.f32 %v770, %v836
      %v869 = vadd.f32 %v771, %v837
      %v870 = vadd.f32 %v772, %v838
      %v871 = vadd.f32 %v773, %v839
      %v872 = vadd.f32 %v774, %v840
      %v873 = vadd.f32 %v775, %v841
      %v874 = vadd.f32 %v776, %v842
      %v875 = vadd.f32 %v777, %v843
      %v876 = vadd.f32 %v778, %v844
      %v877 = vadd.f32 %v779, %v845
      %v878 = vadd.f32 %v780, %v846
      %v879 = vadd.f32 %v781, %v847
      %v880 = vadd.f32 %v782, %v848
      %v881 = vadd.f32 %v783, %v849
      %v882 = vadd.f32 %v784, %v850
      %v883 = vld [vmem:[#allocation2 + $0x2] sm:$0xff]
      %v884 = vld [vmem:[#allocation2 + $0xa] sm:$0xff]
      %v885 = vld [vmem:[#allocation2 + $0x1a] sm:$0xff]
      %v886 = vld [vmem:[#allocation2 + $0x22] sm:$0xff]
      %v887 = vld [vmem:[#allocation2 + $0x32] sm:$0xff]
      %v888 = vld [vmem:[#allocation2 + $0x3a] sm:$0xff]
      %v889 = vld [vmem:[#allocation2 + $0x4a] sm:$0xff]
      %v890 = vld [vmem:[#allocation2 + $0x52] sm:$0xff]
      %v891 = vld [vmem:[#allocation2 + $0x62] sm:$0xff]
      %v892 = vld [vmem:[#allocation2 + $0x6a] sm:$0xff]
      %v893 = vld [vmem:[#allocation2 + $0x7a] sm:$0xff]
      %v894 = vld [vmem:[#allocation2 + $0x82] sm:$0xff]
      %v895 = vld [vmem:[#allocation2 + $0x92] sm:$0xff]
      %v896 = vld [vmem:[#allocation2 + $0x9a] sm:$0xff]
      %v897 = vld [vmem:[#allocation2 + $0xaa] sm:$0xff]
      %v898 = vld [vmem:[#allocation2 + $0xb2] sm:$0xff]
      %v899 = vld [vmem:[#allocation2 + $0xc2] sm:$0xff]
      %v900 = vld [vmem:[#allocation2 + $0xca] sm:$0xff]
      %v901 = vld [vmem:[#allocation2 + $0xda] sm:$0xff]
      %v902 = vld [vmem:[#allocation2 + $0xe2] sm:$0xff]
      %v903 = vld [vmem:[#allocation2 + $0xf2] sm:$0xff]
      %v904 = vld [vmem:[#allocation2 + $0xfa] sm:$0xff]
      %v905 = vld [vmem:[#allocation2 + $0x10a] sm:$0xff]
      %v906 = vld [vmem:[#allocation2 + $0x112] sm:$0xff]
      %v907 = vld [vmem:[#allocation2 + $0x122] sm:$0xff]
      %v908 = vld [vmem:[#allocation2 + $0x12a] sm:$0xff]
      %v909 = vld [vmem:[#allocation2 + $0x13a] sm:$0xff]
      %v910 = vld [vmem:[#allocation2 + $0x142] sm:$0xff]
      %v911 = vld [vmem:[#allocation2 + $0x152] sm:$0xff]
      %v912 = vld [vmem:[#allocation2 + $0x15a] sm:$0xff]
      %v913 = vld [vmem:[#allocation2 + $0x16a] sm:$0xff]
      %v914 = vld [vmem:[#allocation2 + $0x172] sm:$0xff]
      %v915 = vld [vmem:[%s3 + $0x2] sm:$0x1]
      %v916 = vperm.slane %v915, 0
      %v917 = vmul.f32 %v883, %v916
      %v918 = vmul.f32 %v884, %v916
      %v919 = vmul.f32 %v885, %v916
      %v920 = vmul.f32 %v886, %v916
      %v921 = vmul.f32 %v887, %v916
      %v922 = vmul.f32 %v888, %v916
      %v923 = vmul.f32 %v889, %v916
      %v924 = vmul.f32 %v890, %v916
      %v925 = vmul.f32 %v891, %v916
      %v926 = vmul.f32 %v892, %v916
      %v927 = vmul.f32 %v893, %v916
      %v928 = vmul.f32 %v894, %v916
      %v929 = vmul.f32 %v895, %v916
      %v930 = vmul.f32 %v896, %v916
      %v931 = vmul.f32 %v897, %v916
      %v932 = vmul.f32 %v898, %v916
      %v933 = vmul.f32 %v899, %v916
      %v934 = vmul.f32 %v900, %v916
      %v935 = vmul.f32 %v901, %v916
      %v936 = vmul.f32 %v902, %v916
      %v937 = vmul.f32 %v903, %v916
      %v938 = vmul.f32 %v904, %v916
      %v939 = vmul.f32 %v905, %v916
      %v940 = vmul.f32 %v906, %v916
      %v941 = vmul.f32 %v907, %v916
      %v942 = vmul.f32 %v908, %v916
      %v943 = vmul.f32 %v909, %v916
      %v944 = vmul.f32 %v910, %v916
      %v945 = vmul.f32 %v911, %v916
      %v946 = vmul.f32 %v912, %v916
      %v947 = vmul.f32 %v913, %v916
      %v948 = vmul.f32 %v914, %v916
      %v949 = vadd.f32 %v851, %v917
      %v950 = vadd.f32 %v852, %v918
      %v951 = vadd.f32 %v853, %v919
      %v952 = vadd.f32 %v854, %v920
      %v953 = vadd.f32 %v855, %v921
      %v954 = vadd.f32 %v856, %v922
      %v955 = vadd.f32 %v857, %v923
      %v956 = vadd.f32 %v858, %v924
      %v957 = vadd.f32 %v859, %v925
      %v958 = vadd.f32 %v860, %v926
      %v959 = vadd.f32 %v861, %v927
      %v960 = vadd.f32 %v862, %v928
      %v961 = vadd.f32 %v863, %v929
      %v962 = vadd.f32 %v864, %v930
      %v963 = vadd.f32 %v865, %v931
      %v964 = vadd.f32 %v866, %v932
      %v965 = vadd.f32 %v867, %v933
      %v966 = vadd.f32 %v868, %v934
      %v967 = vadd.f32 %v869, %v935
      %v968 = vadd.f32 %v870, %v936
      %v969 = vadd.f32 %v871, %v937
      %v970 = vadd.f32 %v872, %v938
      %v971 = vadd.f32 %v873, %v939
      %v972 = vadd.f32 %v874, %v940
      %v973 = vadd.f32 %v875, %v941
      %v974 = vadd.f32 %v876, %v942
      %v975 = vadd.f32 %v877, %v943
      %v976 = vadd.f32 %v878, %v944
      %v977 = vadd.f32 %v879, %v945
      %v978 = vadd.f32 %v880, %v946
      %v979 = vadd.f32 %v881, %v947
      %v980 = vadd.f32 %v882, %v948
      %v981 = vld [vmem:[%s654] sm:$0xff]
      %v982 = vld [vmem:[%s654 + $0x8] sm:$0xff]
      %v983 = vld [vmem:[%s654 + $0x18] sm:$0xff]
      %v984 = vld [vmem:[%s654 + $0x20] sm:$0xff]
      %v985 = vld [vmem:[%s654 + $0x30] sm:$0xff]
      %v986 = vld [vmem:[%s654 + $0x38] sm:$0xff]
      %v987 = vld [vmem:[%s654 + $0x48] sm:$0xff]
      %v988 = vld [vmem:[%s654 + $0x50] sm:$0xff]
      %v989 = vld [vmem:[%s654 + $0x60] sm:$0xff]
      %v990 = vld [vmem:[%s654 + $0x68] sm:$0xff]
      %v991 = vld [vmem:[%s654 + $0x78] sm:$0xff]
      %v992 = vld [vmem:[%s654 + $0x80] sm:$0xff]
      %v993 = vld [vmem:[%s654 + $0x90] sm:$0xff]
      %v994 = vld [vmem:[%s654 + $0x98] sm:$0xff]
      %v995 = vld [vmem:[%s654 + $0xa8] sm:$0xff]
      %v996 = vld [vmem:[%s654 + $0xb0] sm:$0xff]
      %v997 = vld [vmem:[%s654 + $0xc0] sm:$0xff]
      %v998 = vld [vmem:[%s654 + $0xc8] sm:$0xff]
      %v999 = vld [vmem:[%s654 + $0xd8] sm:$0xff]
      %v1000 = vld [vmem:[%s654 + $0xe0] sm:$0xff]
      %v1001 = vld [vmem:[%s654 + $0xf0] sm:$0xff]
      %v1002 = vld [vmem:[%s654 + $0xf8] sm:$0xff]
      %v1003 = vld [vmem:[%s654 + $0x108] sm:$0xff]
      %v1004 = vld [vmem:[%s654 + $0x110] sm:$0xff]
      %v1005 = vld [vmem:[%s654 + $0x120] sm:$0xff]
      %v1006 = vld [vmem:[%s654 + $0x128] sm:$0xff]
      %v1007 = vld [vmem:[%s654 + $0x138] sm:$0xff]
      %v1008 = vld [vmem:[%s654 + $0x140] sm:$0xff]
      %v1009 = vld [vmem:[%s654 + $0x150] sm:$0xff]
      %v1010 = vld [vmem:[%s654 + $0x158] sm:$0xff]
      %v1011 = vld [vmem:[%s654 + $0x168] sm:$0xff]
      %v1012 = vld [vmem:[%s654 + $0x170] sm:$0xff]
      %s1013 = scalar_lea.vmem %s3, 4
      %v1014 = vld [vmem:[%s1013] sm:$0x1]
      %v1015 = vperm.slane %v1014, 0
      %v1016 = vmul.f32 %v981, %v1015
      %v1017 = vmul.f32 %v982, %v1015
      %v1018 = vmul.f32 %v983, %v1015
      %v1019 = vmul.f32 %v984, %v1015
      %v1020 = vmul.f32 %v985, %v1015
      %v1021 = vmul.f32 %v986, %v1015
      %v1022 = vmul.f32 %v987, %v1015
      %v1023 = vmul.f32 %v988, %v1015
      %v1024 = vmul.f32 %v989, %v1015
      %v1025 = vmul.f32 %v990, %v1015
      %v1026 = vmul.f32 %v991, %v1015
      %v1027 = vmul.f32 %v992, %v1015
      %v1028 = vmul.f32 %v993, %v1015
      %v1029 = vmul.f32 %v994, %v1015
      %v1030 = vmul.f32 %v995, %v1015
      %v1031 = vmul.f32 %v996, %v1015
      %v1032 = vmul.f32 %v997, %v1015
      %v1033 = vmul.f32 %v998, %v1015
      %v1034 = vmul.f32 %v999, %v1015
      %v1035 = vmul.f32 %v1000, %v1015
      %v1036 = vmul.f32 %v1001, %v1015
      %v1037 = vmul.f32 %v1002, %v1015
      %v1038 = vmul.f32 %v1003, %v1015
      %v1039 = vmul.f32 %v1004, %v1015
      %v1040 = vmul.f32 %v1005, %v1015
      %v1041 = vmul.f32 %v1006, %v1015
      %v1042 = vmul.f32 %v1007, %v1015
      %v1043 = vmul.f32 %v1008, %v1015
      %v1044 = vmul.f32 %v1009, %v1015
      %v1045 = vmul.f32 %v1010, %v1015
      %v1046 = vmul.f32 %v1011, %v1015
      %v1047 = vmul.f32 %v1012, %v1015
      %v1048 = vadd.f32 %v949, %v1016
      %v1049 = vadd.f32 %v950, %v1017
      %v1050 = vadd.f32 %v951, %v1018
      %v1051 = vadd.f32 %v952, %v1019
      %v1052 = vadd.f32 %v953, %v1020
      %v1053 = vadd.f32 %v954, %v1021
      %v1054 = vadd.f32 %v955, %v1022
      %v1055 = vadd.f32 %v956, %v1023
      %v1056 = vadd.f32 %v957, %v1024
      %v1057 = vadd.f32 %v958, %v1025
      %v1058 = vadd.f32 %v959, %v1026
      %v1059 = vadd.f32 %v960, %v1027
      %v1060 = vadd.f32 %v961, %v1028
      %v1061 = vadd.f32 %v962, %v1029
      %v1062 = vadd.f32 %v963, %v1030
      %v1063 = vadd.f32 %v964, %v1031
      %v1064 = vadd.f32 %v965, %v1032
      %v1065 = vadd.f32 %v966, %v1033
      %v1066 = vadd.f32 %v967, %v1034
      %v1067 = vadd.f32 %v968, %v1035
      %v1068 = vadd.f32 %v969, %v1036
      %v1069 = vadd.f32 %v970, %v1037
      %v1070 = vadd.f32 %v971, %v1038
      %v1071 = vadd.f32 %v972, %v1039
      %v1072 = vadd.f32 %v973, %v1040
      %v1073 = vadd.f32 %v974, %v1041
      %v1074 = vadd.f32 %v975, %v1042
      %v1075 = vadd.f32 %v976, %v1043
      %v1076 = vadd.f32 %v977, %v1044
      %v1077 = vadd.f32 %v978, %v1045
      %v1078 = vadd.f32 %v979, %v1046
      %v1079 = vadd.f32 %v980, %v1047
      %v1080 = vld [vmem:[%s654 + $0x1] sm:$0xff]
      %v1081 = vld [vmem:[%s654 + $0x9] sm:$0xff]
      %v1082 = vld [vmem:[%s654 + $0x19] sm:$0xff]
      %v1083 = vld [vmem:[%s654 + $0x21] sm:$0xff]
      %v1084 = vld [vmem:[%s654 + $0x31] sm:$0xff]
      %v1085 = vld [vmem:[%s654 + $0x39] sm:$0xff]
      %v1086 = vld [vmem:[%s654 + $0x49] sm:$0xff]
      %v1087 = vld [vmem:[%s654 + $0x51] sm:$0xff]
      %v1088 = vld [vmem:[%s654 + $0x61] sm:$0xff]
      %v1089 = vld [vmem:[%s654 + $0x69] sm:$0xff]
      %v1090 = vld [vmem:[%s654 + $0x79] sm:$0xff]
      %v1091 = vld [vmem:[%s654 + $0x81] sm:$0xff]
      %v1092 = vld [vmem:[%s654 + $0x91] sm:$0xff]
      %v1093 = vld [vmem:[%s654 + $0x99] sm:$0xff]
      %v1094 = vld [vmem:[%s654 + $0xa9] sm:$0xff]
      %v1095 = vld [vmem:[%s654 + $0xb1] sm:$0xff]
      %v1096 = vld [vmem:[%s654 + $0xc1] sm:$0xff]
      %v1097 = vld [vmem:[%s654 + $0xc9] sm:$0xff]
      %v1098 = vld [vmem:[%s654 + $0xd9] sm:$0xff]
      %v1099 = vld [vmem:[%s654 + $0xe1] sm:$0xff]
      %v1100 = vld [vmem:[%s654 + $0xf1] sm:$0xff]
      %v1101 = vld [vmem:[%s654 + $0xf9] sm:$0xff]
      %v1102 = vld [vmem:[%s654 + $0x109] sm:$0xff]
      %v1103 = vld [vmem:[%s654 + $0x111] sm:$0xff]
      %v1104 = vld [vmem:[%s654 + $0x121] sm:$0xff]
      %v1105 = vld [vmem:[%s654 + $0x129] sm:$0xff]
      %v1106 = vld [vmem:[%s654 + $0x139] sm:$0xff]
      %v1107 = vld [vmem:[%s654 + $0x141] sm:$0xff]
      %v1108 = vld [vmem:[%s654 + $0x151] sm:$0xff]
      %v1109 = vld [vmem:[%s654 + $0x159] sm:$0xff]
      %v1110 = vld [vmem:[%s654 + $0x169] sm:$0xff]
      %v1111 = vld [vmem:[%s654 + $0x171] sm:$0xff]
      %v1112 = vld [vmem:[%s1013 + $0x1] sm:$0x1]
      %v1113 = vperm.slane %v1112, 0
      %v1114 = vmul.f32 %v1080, %v1113
      %v1115 = vmul.f32 %v1081, %v1113
      %v1116 = vmul.f32 %v1082, %v1113
      %v1117 = vmul.f32 %v1083, %v1113
      %v1118 = vmul.f32 %v1084, %v1113
      %v1119 = vmul.f32 %v1085, %v1113
      %v1120 = vmul.f32 %v1086, %v1113
      %v1121 = vmul.f32 %v1087, %v1113
      %v1122 = vmul.f32 %v1088, %v1113
      %v1123 = vmul.f32 %v1089, %v1113
      %v1124 = vmul.f32 %v1090, %v1113
      %v1125 = vmul.f32 %v1091, %v1113
      %v1126 = vmul.f32 %v1092, %v1113
      %v1127 = vmul.f32 %v1093, %v1113
      %v1128 = vmul.f32 %v1094, %v1113
      %v1129 = vmul.f32 %v1095, %v1113
      %v1130 = vmul.f32 %v1096, %v1113
      %v1131 = vmul.f32 %v1097, %v1113
      %v1132 = vmul.f32 %v1098, %v1113
      %v1133 = vmul.f32 %v1099, %v1113
      %v1134 = vmul.f32 %v1100, %v1113
      %v1135 = vmul.f32 %v1101, %v1113
      %v1136 = vmul.f32 %v1102, %v1113
      %v1137 = vmul.f32 %v1103, %v1113
      %v1138 = vmul.f32 %v1104, %v1113
      %v1139 = vmul.f32 %v1105, %v1113
      %v1140 = vmul.f32 %v1106, %v1113
      %v1141 = vmul.f32 %v1107, %v1113
      %v1142 = vmul.f32 %v1108, %v1113
      %v1143 = vmul.f32 %v1109, %v1113
      %v1144 = vmul.f32 %v1110, %v1113
      %v1145 = vmul.f32 %v1111, %v1113
      %v1146 = vadd.f32 %v1048, %v1114
      %v1147 = vadd.f32 %v1049, %v1115
      %v1148 = vadd.f32 %v1050, %v1116
      %v1149 = vadd.f32 %v1051, %v1117
      %v1150 = vadd.f32 %v1052, %v1118
      %v1151 = vadd.f32 %v1053, %v1119
      %v1152 = vadd.f32 %v1054, %v1120
      %v1153 = vadd.f32 %v1055, %v1121
      %v1154 = vadd.f32 %v1056, %v1122
      %v1155 = vadd.f32 %v1057, %v1123
      %v1156 = vadd.f32 %v1058, %v1124
      %v1157 = vadd.f32 %v1059, %v1125
      %v1158 = vadd.f32 %v1060, %v1126
      %v1159 = vadd.f32 %v1061, %v1127
      %v1160 = vadd.f32 %v1062, %v1128
      %v1161 = vadd.f32 %v1063, %v1129
      %v1162 = vadd.f32 %v1064, %v1130
      %v1163 = vadd.f32 %v1065, %v1131
      %v1164 = vadd.f32 %v1066, %v1132
      %v1165 = vadd.f32 %v1067, %v1133
      %v1166 = vadd.f32 %v1068, %v1134
      %v1167 = vadd.f32 %v1069, %v1135
      %v1168 = vadd.f32 %v1070, %v1136
      %v1169 = vadd.f32 %v1071, %v1137
      %v1170 = vadd.f32 %v1072, %v1138
      %v1171 = vadd.f32 %v1073, %v1139
      %v1172 = vadd.f32 %v1074, %v1140
      %v1173 = vadd.f32 %v1075, %v1141
      %v1174 = vadd.f32 %v1076, %v1142
      %v1175 = vadd.f32 %v1077, %v1143
      %v1176 = vadd.f32 %v1078, %v1144
      %v1177 = vadd.f32 %v1079, %v1145
      %v1178 = vld [vmem:[%s654 + $0x2] sm:$0xff]
      %v1179 = vld [vmem:[%s654 + $0xa] sm:$0xff]
      %v1180 = vld [vmem:[%s654 + $0x1a] sm:$0xff]
      %v1181 = vld [vmem:[%s654 + $0x22] sm:$0xff]
      %v1182 = vld [vmem:[%s654 + $0x32] sm:$0xff]
      %v1183 = vld [vmem:[%s654 + $0x3a] sm:$0xff]
      %v1184 = vld [vmem:[%s654 + $0x4a] sm:$0xff]
      %v1185 = vld [vmem:[%s654 + $0x52] sm:$0xff]
      %v1186 = vld [vmem:[%s654 + $0x62] sm:$0xff]
      %v1187 = vld [vmem:[%s654 + $0x6a] sm:$0xff]
      %v1188 = vld [vmem:[%s654 + $0x7a] sm:$0xff]
      %v1189 = vld [vmem:[%s654 + $0x82] sm:$0xff]
      %v1190 = vld [vmem:[%s654 + $0x92] sm:$0xff]
      %v1191 = vld [vmem:[%s654 + $0x9a] sm:$0xff]
      %v1192 = vld [vmem:[%s654 + $0xaa] sm:$0xff]
      %v1193 = vld [vmem:[%s654 + $0xb2] sm:$0xff]
      %v1194 = vld [vmem:[%s654 + $0xc2] sm:$0xff]
      %v1195 = vld [vmem:[%s654 + $0xca] sm:$0xff]
      %v1196 = vld [vmem:[%s654 + $0xda] sm:$0xff]
      %v1197 = vld [vmem:[%s654 + $0xe2] sm:$0xff]
      %v1198 = vld [vmem:[%s654 + $0xf2] sm:$0xff]
      %v1199 = vld [vmem:[%s654 + $0xfa] sm:$0xff]
      %v1200 = vld [vmem:[%s654 + $0x10a] sm:$0xff]
      %v1201 = vld [vmem:[%s654 + $0x112] sm:$0xff]
      %v1202 = vld [vmem:[%s654 + $0x122] sm:$0xff]
      %v1203 = vld [vmem:[%s654 + $0x12a] sm:$0xff]
      %v1204 = vld [vmem:[%s654 + $0x13a] sm:$0xff]
      %v1205 = vld [vmem:[%s654 + $0x142] sm:$0xff]
      %v1206 = vld [vmem:[%s654 + $0x152] sm:$0xff]
      %v1207 = vld [vmem:[%s654 + $0x15a] sm:$0xff]
      %v1208 = vld [vmem:[%s654 + $0x16a] sm:$0xff]
      %v1209 = vld [vmem:[%s654 + $0x172] sm:$0xff]
      %v1210 = vld [vmem:[%s1013 + $0x2] sm:$0x1]
      %v1211 = vperm.slane %v1210, 0
      %v1212 = vmul.f32 %v1178, %v1211
      %v1213 = vmul.f32 %v1179, %v1211
      %v1214 = vmul.f32 %v1180, %v1211
      %v1215 = vmul.f32 %v1181, %v1211
      %v1216 = vmul.f32 %v1182, %v1211
      %v1217 = vmul.f32 %v1183, %v1211
      %v1218 = vmul.f32 %v1184, %v1211
      %v1219 = vmul.f32 %v1185, %v1211
      %v1220 = vmul.f32 %v1186, %v1211
      %v1221 = vmul.f32 %v1187, %v1211
      %v1222 = vmul.f32 %v1188, %v1211
      %v1223 = vmul.f32 %v1189, %v1211
      %v1224 = vmul.f32 %v1190, %v1211
      %v1225 = vmul.f32 %v1191, %v1211
      %v1226 = vmul.f32 %v1192, %v1211
      %v1227 = vmul.f32 %v1193, %v1211
      %v1228 = vmul.f32 %v1194, %v1211
      %v1229 = vmul.f32 %v1195, %v1211
      %v1230 = vmul.f32 %v1196, %v1211
      %v1231 = vmul.f32 %v1197, %v1211
      %v1232 = vmul.f32 %v1198, %v1211
      %v1233 = vmul.f32 %v1199, %v1211
      %v1234 = vmul.f32 %v1200, %v1211
      %v1235 = vmul.f32 %v1201, %v1211
      %v1236 = vmul.f32 %v1202, %v1211
      %v1237 = vmul.f32 %v1203, %v1211
      %v1238 = vmul.f32 %v1204, %v1211
      %v1239 = vmul.f32 %v1205, %v1211
      %v1240 = vmul.f32 %v1206, %v1211
      %v1241 = vmul.f32 %v1207, %v1211
      %v1242 = vmul.f32 %v1208, %v1211
      %v1243 = vmul.f32 %v1209, %v1211
      %v1244 = vadd.f32 %v1146, %v1212
      %v1245 = vadd.f32 %v1147, %v1213
      %v1246 = vadd.f32 %v1148, %v1214
      %v1247 = vadd.f32 %v1149, %v1215
      %v1248 = vadd.f32 %v1150, %v1216
      %v1249 = vadd.f32 %v1151, %v1217
      %v1250 = vadd.f32 %v1152, %v1218
      %v1251 = vadd.f32 %v1153, %v1219
      %v1252 = vadd.f32 %v1154, %v1220
      %v1253 = vadd.f32 %v1155, %v1221
      %v1254 = vadd.f32 %v1156, %v1222
      %v1255 = vadd.f32 %v1157, %v1223
      %v1256 = vadd.f32 %v1158, %v1224
      %v1257 = vadd.f32 %v1159, %v1225
      %v1258 = vadd.f32 %v1160, %v1226
      %v1259 = vadd.f32 %v1161, %v1227
      %v1260 = vadd.f32 %v1162, %v1228
      %v1261 = vadd.f32 %v1163, %v1229
      %v1262 = vadd.f32 %v1164, %v1230
      %v1263 = vadd.f32 %v1165, %v1231
      %v1264 = vadd.f32 %v1166, %v1232
      %v1265 = vadd.f32 %v1167, %v1233
      %v1266 = vadd.f32 %v1168, %v1234
      %v1267 = vadd.f32 %v1169, %v1235
      %v1268 = vadd.f32 %v1170, %v1236
      %v1269 = vadd.f32 %v1171, %v1237
      %v1270 = vadd.f32 %v1172, %v1238
      %v1271 = vadd.f32 %v1173, %v1239
      %v1272 = vadd.f32 %v1174, %v1240
      %v1273 = vadd.f32 %v1175, %v1241
      %v1274 = vadd.f32 %v1176, %v1242
      %v1275 = vadd.f32 %v1177, %v1243
      %s1276 = scalar_lea.vmem [#allocation2], 48
      %v1277 = vld [vmem:[%s1276] sm:$0xff]
      %v1278 = vld [vmem:[%s1276 + $0x8] sm:$0xff]
      %v1279 = vld [vmem:[%s1276 + $0x18] sm:$0xff]
      %v1280 = vld [vmem:[%s1276 + $0x20] sm:$0xff]
      %v1281 = vld [vmem:[%s1276 + $0x30] sm:$0xff]
      %v1282 = vld [vmem:[%s1276 + $0x38] sm:$0xff]
      %v1283 = vld [vmem:[%s1276 + $0x48] sm:$0xff]
      %v1284 = vld [vmem:[%s1276 + $0x50] sm:$0xff]
      %v1285 = vld [vmem:[%s1276 + $0x60] sm:$0xff]
      %v1286 = vld [vmem:[%s1276 + $0x68] sm:$0xff]
      %v1287 = vld [vmem:[%s1276 + $0x78] sm:$0xff]
      %v1288 = vld [vmem:[%s1276 + $0x80] sm:$0xff]
      %v1289 = vld [vmem:[%s1276 + $0x90] sm:$0xff]
      %v1290 = vld [vmem:[%s1276 + $0x98] sm:$0xff]
      %v1291 = vld [vmem:[%s1276 + $0xa8] sm:$0xff]
      %v1292 = vld [vmem:[%s1276 + $0xb0] sm:$0xff]
      %v1293 = vld [vmem:[%s1276 + $0xc0] sm:$0xff]
      %v1294 = vld [vmem:[%s1276 + $0xc8] sm:$0xff]
      %v1295 = vld [vmem:[%s1276 + $0xd8] sm:$0xff]
      %v1296 = vld [vmem:[%s1276 + $0xe0] sm:$0xff]
      %v1297 = vld [vmem:[%s1276 + $0xf0] sm:$0xff]
      %v1298 = vld [vmem:[%s1276 + $0xf8] sm:$0xff]
      %v1299 = vld [vmem:[%s1276 + $0x108] sm:$0xff]
      %v1300 = vld [vmem:[%s1276 + $0x110] sm:$0xff]
      %v1301 = vld [vmem:[%s1276 + $0x120] sm:$0xff]
      %v1302 = vld [vmem:[%s1276 + $0x128] sm:$0xff]
      %v1303 = vld [vmem:[%s1276 + $0x138] sm:$0xff]
      %v1304 = vld [vmem:[%s1276 + $0x140] sm:$0xff]
      %v1305 = vld [vmem:[%s1276 + $0x150] sm:$0xff]
      %v1306 = vld [vmem:[%s1276 + $0x158] sm:$0xff]
      %v1307 = vld [vmem:[%s1276 + $0x168] sm:$0xff]
      %v1308 = vld [vmem:[%s1276 + $0x170] sm:$0xff]
      %s1309 = scalar_lea.vmem %s3, 8
      %v1310 = vld [vmem:[%s1309] sm:$0x1]
      %v1311 = vperm.slane %v1310, 0
      %v1312 = vmul.f32 %v1277, %v1311
      %v1313 = vmul.f32 %v1278, %v1311
      %v1314 = vmul.f32 %v1279, %v1311
      %v1315 = vmul.f32 %v1280, %v1311
      %v1316 = vmul.f32 %v1281, %v1311
      %v1317 = vmul.f32 %v1282, %v1311
      %v1318 = vmul.f32 %v1283, %v1311
      %v1319 = vmul.f32 %v1284, %v1311
      %v1320 = vmul.f32 %v1285, %v1311
      %v1321 = vmul.f32 %v1286, %v1311
      %v1322 = vmul.f32 %v1287, %v1311
      %v1323 = vmul.f32 %v1288, %v1311
      %v1324 = vmul.f32 %v1289, %v1311
      %v1325 = vmul.f32 %v1290, %v1311
      %v1326 = vmul.f32 %v1291, %v1311
      %v1327 = vmul.f32 %v1292, %v1311
      %v1328 = vmul.f32 %v1293, %v1311
      %v1329 = vmul.f32 %v1294, %v1311
      %v1330 = vmul.f32 %v1295, %v1311
      %v1331 = vmul.f32 %v1296, %v1311
      %v1332 = vmul.f32 %v1297, %v1311
      %v1333 = vmul.f32 %v1298, %v1311
      %v1334 = vmul.f32 %v1299, %v1311
      %v1335 = vmul.f32 %v1300, %v1311
      %v1336 = vmul.f32 %v1301, %v1311
      %v1337 = vmul.f32 %v1302, %v1311
      %v1338 = vmul.f32 %v1303, %v1311
      %v1339 = vmul.f32 %v1304, %v1311
      %v1340 = vmul.f32 %v1305, %v1311
      %v1341 = vmul.f32 %v1306, %v1311
      %v1342 = vmul.f32 %v1307, %v1311
      %v1343 = vmul.f32 %v1308, %v1311
      %v1344 = vadd.f32 %v1244, %v1312
      %v1345 = vadd.f32 %v1245, %v1313
      %v1346 = vadd.f32 %v1246, %v1314
      %v1347 = vadd.f32 %v1247, %v1315
      %v1348 = vadd.f32 %v1248, %v1316
      %v1349 = vadd.f32 %v1249, %v1317
      %v1350 = vadd.f32 %v1250, %v1318
      %v1351 = vadd.f32 %v1251, %v1319
      %v1352 = vadd.f32 %v1252, %v1320
      %v1353 = vadd.f32 %v1253, %v1321
      %v1354 = vadd.f32 %v1254, %v1322
      %v1355 = vadd.f32 %v1255, %v1323
      %v1356 = vadd.f32 %v1256, %v1324
      %v1357 = vadd.f32 %v1257, %v1325
      %v1358 = vadd.f32 %v1258, %v1326
      %v1359 = vadd.f32 %v1259, %v1327
      %v1360 = vadd.f32 %v1260, %v1328
      %v1361 = vadd.f32 %v1261, %v1329
      %v1362 = vadd.f32 %v1262, %v1330
      %v1363 = vadd.f32 %v1263, %v1331
      %v1364 = vadd.f32 %v1264, %v1332
      %v1365 = vadd.f32 %v1265, %v1333
      %v1366 = vadd.f32 %v1266, %v1334
      %v1367 = vadd.f32 %v1267, %v1335
      %v1368 = vadd.f32 %v1268, %v1336
      %v1369 = vadd.f32 %v1269, %v1337
      %v1370 = vadd.f32 %v1270, %v1338
      %v1371 = vadd.f32 %v1271, %v1339
      %v1372 = vadd.f32 %v1272, %v1340
      %v1373 = vadd.f32 %v1273, %v1341
      %v1374 = vadd.f32 %v1274, %v1342
      %v1375 = vadd.f32 %v1275, %v1343
      %v1376 = vld [vmem:[%s1276 + $0x1] sm:$0xff]
      %v1377 = vld [vmem:[%s1276 + $0x9] sm:$0xff]
      %v1378 = vld [vmem:[%s1276 + $0x19] sm:$0xff]
      %v1379 = vld [vmem:[%s1276 + $0x21] sm:$0xff]
      %v1380 = vld [vmem:[%s1276 + $0x31] sm:$0xff]
      %v1381 = vld [vmem:[%s1276 + $0x39] sm:$0xff]
      %v1382 = vld [vmem:[%s1276 + $0x49] sm:$0xff]
      %v1383 = vld [vmem:[%s1276 + $0x51] sm:$0xff]
      %v1384 = vld [vmem:[%s1276 + $0x61] sm:$0xff]
      %v1385 = vld [vmem:[%s1276 + $0x69] sm:$0xff]
      %v1386 = vld [vmem:[%s1276 + $0x79] sm:$0xff]
      %v1387 = vld [vmem:[%s1276 + $0x81] sm:$0xff]
      %v1388 = vld [vmem:[%s1276 + $0x91] sm:$0xff]
      %v1389 = vld [vmem:[%s1276 + $0x99] sm:$0xff]
      %v1390 = vld [vmem:[%s1276 + $0xa9] sm:$0xff]
      %v1391 = vld [vmem:[%s1276 + $0xb1] sm:$0xff]
      %v1392 = vld [vmem:[%s1276 + $0xc1] sm:$0xff]
      %v1393 = vld [vmem:[%s1276 + $0xc9] sm:$0xff]
      %v1394 = vld [vmem:[%s1276 + $0xd9] sm:$0xff]
      %v1395 = vld [vmem:[%s1276 + $0xe1] sm:$0xff]
      %v1396 = vld [vmem:[%s1276 + $0xf1] sm:$0xff]
      %v1397 = vld [vmem:[%s1276 + $0xf9] sm:$0xff]
      %v1398 = vld [vmem:[%s1276 + $0x109] sm:$0xff]
      %v1399 = vld [vmem:[%s1276 + $0x111] sm:$0xff]
      %v1400 = vld [vmem:[%s1276 + $0x121] sm:$0xff]
      %v1401 = vld [vmem:[%s1276 + $0x129] sm:$0xff]
      %v1402 = vld [vmem:[%s1276 + $0x139] sm:$0xff]
      %v1403 = vld [vmem:[%s1276 + $0x141] sm:$0xff]
      %v1404 = vld [vmem:[%s1276 + $0x151] sm:$0xff]
      %v1405 = vld [vmem:[%s1276 + $0x159] sm:$0xff]
      %v1406 = vld [vmem:[%s1276 + $0x169] sm:$0xff]
      %v1407 = vld [vmem:[%s1276 + $0x171] sm:$0xff]
      %v1408 = vld [vmem:[%s1309 + $0x1] sm:$0x1]
      %v1409 = vperm.slane %v1408, 0
      %v1410 = vmul.f32 %v1376, %v1409
      %v1411 = vmul.f32 %v1377, %v1409
      %v1412 = vmul.f32 %v1378, %v1409
      %v1413 = vmul.f32 %v1379, %v1409
      %v1414 = vmul.f32 %v1380, %v1409
      %v1415 = vmul.f32 %v1381, %v1409
      %v1416 = vmul.f32 %v1382, %v1409
      %v1417 = vmul.f32 %v1383, %v1409
      %v1418 = vmul.f32 %v1384, %v1409
      %v1419 = vmul.f32 %v1385, %v1409
      %v1420 = vmul.f32 %v1386, %v1409
      %v1421 = vmul.f32 %v1387, %v1409
      %v1422 = vmul.f32 %v1388, %v1409
      %v1423 = vmul.f32 %v1389, %v1409
      %v1424 = vmul.f32 %v1390, %v1409
      %v1425 = vmul.f32 %v1391, %v1409
      %v1426 = vmul.f32 %v1392, %v1409
      %v1427 = vmul.f32 %v1393, %v1409
      %v1428 = vmul.f32 %v1394, %v1409
      %v1429 = vmul.f32 %v1395, %v1409
      %v1430 = vmul.f32 %v1396, %v1409
      %v1431 = vmul.f32 %v1397, %v1409
      %v1432 = vmul.f32 %v1398, %v1409
      %v1433 = vmul.f32 %v1399, %v1409
      %v1434 = vmul.f32 %v1400, %v1409
      %v1435 = vmul.f32 %v1401, %v1409
      %v1436 = vmul.f32 %v1402, %v1409
      %v1437 = vmul.f32 %v1403, %v1409
      %v1438 = vmul.f32 %v1404, %v1409
      %v1439 = vmul.f32 %v1405, %v1409
      %v1440 = vmul.f32 %v1406, %v1409
      %v1441 = vmul.f32 %v1407, %v1409
      %v1442 = vadd.f32 %v1344, %v1410
      %v1443 = vadd.f32 %v1345, %v1411
      %v1444 = vadd.f32 %v1346, %v1412
      %v1445 = vadd.f32 %v1347, %v1413
      %v1446 = vadd.f32 %v1348, %v1414
      %v1447 = vadd.f32 %v1349, %v1415
      %v1448 = vadd.f32 %v1350, %v1416
      %v1449 = vadd.f32 %v1351, %v1417
      %v1450 = vadd.f32 %v1352, %v1418
      %v1451 = vadd.f32 %v1353, %v1419
      %v1452 = vadd.f32 %v1354, %v1420
      %v1453 = vadd.f32 %v1355, %v1421
      %v1454 = vadd.f32 %v1356, %v1422
      %v1455 = vadd.f32 %v1357, %v1423
      %v1456 = vadd.f32 %v1358, %v1424
      %v1457 = vadd.f32 %v1359, %v1425
      %v1458 = vadd.f32 %v1360, %v1426
      %v1459 = vadd.f32 %v1361, %v1427
      %v1460 = vadd.f32 %v1362, %v1428
      %v1461 = vadd.f32 %v1363, %v1429
      %v1462 = vadd.f32 %v1364, %v1430
      %v1463 = vadd.f32 %v1365, %v1431
      %v1464 = vadd.f32 %v1366, %v1432
      %v1465 = vadd.f32 %v1367, %v1433
      %v1466 = vadd.f32 %v1368, %v1434
      %v1467 = vadd.f32 %v1369, %v1435
      %v1468 = vadd.f32 %v1370, %v1436
      %v1469 = vadd.f32 %v1371, %v1437
      %v1470 = vadd.f32 %v1372, %v1438
      %v1471 = vadd.f32 %v1373, %v1439
      %v1472 = vadd.f32 %v1374, %v1440
      %v1473 = vadd.f32 %v1375, %v1441
      %v1474 = vld [vmem:[%s1276 + $0x2] sm:$0xff]
      %v1475 = vld [vmem:[%s1276 + $0xa] sm:$0xff]
      %v1476 = vld [vmem:[%s1276 + $0x1a] sm:$0xff]
      %v1477 = vld [vmem:[%s1276 + $0x22] sm:$0xff]
      %v1478 = vld [vmem:[%s1276 + $0x32] sm:$0xff]
      %v1479 = vld [vmem:[%s1276 + $0x3a] sm:$0xff]
      %v1480 = vld [vmem:[%s1276 + $0x4a] sm:$0xff]
      %v1481 = vld [vmem:[%s1276 + $0x52] sm:$0xff]
      %v1482 = vld [vmem:[%s1276 + $0x62] sm:$0xff]
      %v1483 = vld [vmem:[%s1276 + $0x6a] sm:$0xff]
      %v1484 = vld [vmem:[%s1276 + $0x7a] sm:$0xff]
      %v1485 = vld [vmem:[%s1276 + $0x82] sm:$0xff]
      %v1486 = vld [vmem:[%s1276 + $0x92] sm:$0xff]
      %v1487 = vld [vmem:[%s1276 + $0x9a] sm:$0xff]
      %v1488 = vld [vmem:[%s1276 + $0xaa] sm:$0xff]
      %v1489 = vld [vmem:[%s1276 + $0xb2] sm:$0xff]
      %v1490 = vld [vmem:[%s1276 + $0xc2] sm:$0xff]
      %v1491 = vld [vmem:[%s1276 + $0xca] sm:$0xff]
      %v1492 = vld [vmem:[%s1276 + $0xda] sm:$0xff]
      %v1493 = vld [vmem:[%s1276 + $0xe2] sm:$0xff]
      %v1494 = vld [vmem:[%s1276 + $0xf2] sm:$0xff]
      %v1495 = vld [vmem:[%s1276 + $0xfa] sm:$0xff]
      %v1496 = vld [vmem:[%s1276 + $0x10a] sm:$0xff]
      %v1497 = vld [vmem:[%s1276 + $0x112] sm:$0xff]
      %v1498 = vld [vmem:[%s1276 + $0x122] sm:$0xff]
      %v1499 = vld [vmem:[%s1276 + $0x12a] sm:$0xff]
      %v1500 = vld [vmem:[%s1276 + $0x13a] sm:$0xff]
      %v1501 = vld [vmem:[%s1276 + $0x142] sm:$0xff]
      %v1502 = vld [vmem:[%s1276 + $0x152] sm:$0xff]
      %v1503 = vld [vmem:[%s1276 + $0x15a] sm:$0xff]
      %v1504 = vld [vmem:[%s1276 + $0x16a] sm:$0xff]
      %v1505 = vld [vmem:[%s1276 + $0x172] sm:$0xff]
      %v1506 = vld [vmem:[%s1309 + $0x2] sm:$0x1]
      %v1507 = vperm.slane %v1506, 0
      %v1508 = vmul.f32 %v1474, %v1507
      %v1509 = vmul.f32 %v1475, %v1507
      %v1510 = vmul.f32 %v1476, %v1507
      %v1511 = vmul.f32 %v1477, %v1507
      %v1512 = vmul.f32 %v1478, %v1507
      %v1513 = vmul.f32 %v1479, %v1507
      %v1514 = vmul.f32 %v1480, %v1507
      %v1515 = vmul.f32 %v1481, %v1507
      %v1516 = vmul.f32 %v1482, %v1507
      %v1517 = vmul.f32 %v1483, %v1507
      %v1518 = vmul.f32 %v1484, %v1507
      %v1519 = vmul.f32 %v1485, %v1507
      %v1520 = vmul.f32 %v1486, %v1507
      %v1521 = vmul.f32 %v1487, %v1507
      %v1522 = vmul.f32 %v1488, %v1507
      %v1523 = vmul.f32 %v1489, %v1507
      %v1524 = vmul.f32 %v1490, %v1507
      %v1525 = vmul.f32 %v1491, %v1507
      %v1526 = vmul.f32 %v1492, %v1507
      %v1527 = vmul.f32 %v1493, %v1507
      %v1528 = vmul.f32 %v1494, %v1507
      %v1529 = vmul.f32 %v1495, %v1507
      %v1530 = vmul.f32 %v1496, %v1507
      %v1531 = vmul.f32 %v1497, %v1507
      %v1532 = vmul.f32 %v1498, %v1507
      %v1533 = vmul.f32 %v1499, %v1507
      %v1534 = vmul.f32 %v1500, %v1507
      %v1535 = vmul.f32 %v1501, %v1507
      %v1536 = vmul.f32 %v1502, %v1507
      %v1537 = vmul.f32 %v1503, %v1507
      %v1538 = vmul.f32 %v1504, %v1507
      %v1539 = vmul.f32 %v1505, %v1507
      %v1540 = vadd.f32 %v1442, %v1508
      %v1541 = vadd.f32 %v1443, %v1509
      %v1542 = vadd.f32 %v1444, %v1510
      %v1543 = vadd.f32 %v1445, %v1511
      %v1544 = vadd.f32 %v1446, %v1512
      %v1545 = vadd.f32 %v1447, %v1513
      %v1546 = vadd.f32 %v1448, %v1514
      %v1547 = vadd.f32 %v1449, %v1515
      %v1548 = vadd.f32 %v1450, %v1516
      %v1549 = vadd.f32 %v1451, %v1517
      %v1550 = vadd.f32 %v1452, %v1518
      %v1551 = vadd.f32 %v1453, %v1519
      %v1552 = vadd.f32 %v1454, %v1520
      %v1553 = vadd.f32 %v1455, %v1521
      %v1554 = vadd.f32 %v1456, %v1522
      %v1555 = vadd.f32 %v1457, %v1523
      %v1556 = vadd.f32 %v1458, %v1524
      %v1557 = vadd.f32 %v1459, %v1525
      %v1558 = vadd.f32 %v1460, %v1526
      %v1559 = vadd.f32 %v1461, %v1527
      %v1560 = vadd.f32 %v1462, %v1528
      %v1561 = vadd.f32 %v1463, %v1529
      %v1562 = vadd.f32 %v1464, %v1530
      %v1563 = vadd.f32 %v1465, %v1531
      %v1564 = vadd.f32 %v1466, %v1532
      %v1565 = vadd.f32 %v1467, %v1533
      %v1566 = vadd.f32 %v1468, %v1534
      %v1567 = vadd.f32 %v1469, %v1535
      %v1568 = vadd.f32 %v1470, %v1536
      %v1569 = vadd.f32 %v1471, %v1537
      %v1570 = vadd.f32 %v1472, %v1538
      %v1571 = vadd.f32 %v1473, %v1539
      %v1572 = vld [vmem:[%s4] sm:$0x3]
      %v1573 = vld [vmem:[%s5] sm:$0x1]
      %v1575 = vperm.slane %v1573, 0
      %v1578 = vsel %vm385, %v1540, 0
      %v1581 = vsel %vm385, %v1541, 0
      %v1584 = vsel %vm385, %v1542, 0
      %v1587 = vsel %vm385, %v1543, 0
      %v1590 = vsel %vm385, %v1544, 0
      %v1593 = vsel %vm385, %v1545, 0
      %v1596 = vsel %vm385, %v1546, 0
      %v1599 = vsel %vm385, %v1547, 0
      %v1602 = vsel %vm385, %v1548, 0
      %v1605 = vsel %vm385, %v1549, 0
      %v1608 = vsel %vm385, %v1550, 0
      %v1611 = vsel %vm385, %v1551, 0
      %v1614 = vsel %vm385, %v1552, 0
      %v1617 = vsel %vm385, %v1553, 0
      %v1620 = vsel %vm385, %v1554, 0
      %v1623 = vsel %vm385, %v1555, 0
      %v1626 = vsel %vm385, %v1556, 0
      %v1629 = vsel %vm385, %v1557, 0
      %v1632 = vsel %vm385, %v1558, 0
      %v1635 = vsel %vm385, %v1559, 0
      %v1638 = vsel %vm385, %v1560, 0
      %v1641 = vsel %vm385, %v1561, 0
      %v1644 = vsel %vm385, %v1562, 0
      %v1647 = vsel %vm385, %v1563, 0
      %v1650 = vsel %vm385, %v1564, 0
      %v1653 = vsel %vm385, %v1565, 0
      %v1656 = vsel %vm385, %v1566, 0
      %v1659 = vsel %vm385, %v1567, 0
      %v1662 = vsel %vm385, %v1568, 0
      %v1665 = vsel %vm385, %v1569, 0
      %v1668 = vsel %vm385, %v1570, 0
      %v1671 = vsel %vm385, %v1571, 0
      %v1674 = vsel %vm450, %v1572, 0
      %1676 = vmatpush.msra.mxu0 0.0
      %1677 = vmatpush.msra.mxu0 0.0
      %1678 = vmatpush.msra.mxu0 0.0
      %1679 = vmatpush.msra.mxu0 0.0
      %1680 = vmatpush.msra.mxu0 0.0
      %1681 = vmatpush.msra.mxu0 0.0
      %1682 = vmatpush.msra.mxu0 0.0
      %1683 = vmatpush.msra.mxu0 0.0
      %1684 = vmatpush.msra.mxu0 0.0
      %1685 = vmatpush.msra.mxu0 0.0
      %1686 = vmatpush.msra.mxu0 0.0
      %1687 = vmatpush.msra.mxu0 0.0
      %1688 = vmatpush.msra.mxu0 0.0
      %1689 = vmatpush.msra.mxu0 0.0
      %1690 = vmatpush.msra.mxu0 0.0
      %1691 = vmatpush.msra.mxu0 %v1674
      %1692 = vmatmul.f32.gmra.mxu0 %v1578
      %v1693 = vpop.f32.mrf.mxu0
      %v1694 = vadd.f32 %v1575, %v1693
      %1695 = vmatmul.f32.gmra.mxu0 %v1581
      %v1696 = vpop.f32.mrf.mxu0
      %v1697 = vadd.f32 %v1575, %v1696
      %1698 = vmatmul.f32.gmra.mxu0 %v1584
      %v1699 = vpop.f32.mrf.mxu0
      %v1700 = vadd.f32 %v1575, %v1699
      %1701 = vmatmul.f32.gmra.mxu0 %v1587
      %v1702 = vpop.f32.mrf.mxu0
      %v1703 = vadd.f32 %v1575, %v1702
      %1704 = vmatmul.f32.gmra.mxu0 %v1590
      %v1705 = vpop.f32.mrf.mxu0
      %v1706 = vadd.f32 %v1575, %v1705
      %1707 = vmatmul.f32.gmra.mxu0 %v1593
      %v1708 = vpop.f32.mrf.mxu0
      %v1709 = vadd.f32 %v1575, %v1708
      %1710 = vmatmul.f32.gmra.mxu0 %v1596
      %v1711 = vpop.f32.mrf.mxu0
      %v1712 = vadd.f32 %v1575, %v1711
      %1713 = vmatmul.f32.gmra.mxu0 %v1599
      %v1714 = vpop.f32.mrf.mxu0
      %v1715 = vadd.f32 %v1575, %v1714
      %1716 = vmatmul.f32.gmra.mxu0 %v1602
      %v1717 = vpop.f32.mrf.mxu0
      %v1718 = vadd.f32 %v1575, %v1717
      %1719 = vmatmul.f32.gmra.mxu0 %v1605
      %v1720 = vpop.f32.mrf.mxu0
      %v1721 = vadd.f32 %v1575, %v1720
      %1722 = vmatmul.f32.gmra.mxu0 %v1608
      %v1723 = vpop.f32.mrf.mxu0
      %v1724 = vadd.f32 %v1575, %v1723
      %1725 = vmatmul.f32.gmra.mxu0 %v1611
      %v1726 = vpop.f32.mrf.mxu0
      %v1727 = vadd.f32 %v1575, %v1726
      %1728 = vmatmul.f32.gmra.mxu0 %v1614
      %v1729 = vpop.f32.mrf.mxu0
      %v1730 = vadd.f32 %v1575, %v1729
      %1731 = vmatmul.f32.gmra.mxu0 %v1617
      %v1732 = vpop.f32.mrf.mxu0
      %v1733 = vadd.f32 %v1575, %v1732
      %1734 = vmatmul.f32.gmra.mxu0 %v1620
      %v1735 = vpop.f32.mrf.mxu0
      %v1736 = vadd.f32 %v1575, %v1735
      %1737 = vmatmul.f32.gmra.mxu0 %v1623
      %v1738 = vpop.f32.mrf.mxu0
      %v1739 = vadd.f32 %v1575, %v1738
      %1740 = vmatmul.f32.gmra.mxu0 %v1626
      %v1741 = vpop.f32.mrf.mxu0
      %v1742 = vadd.f32 %v1575, %v1741
      %1743 = vmatmul.f32.gmra.mxu0 %v1629
      %v1744 = vpop.f32.mrf.mxu0
      %v1745 = vadd.f32 %v1575, %v1744
      %1746 = vmatmul.f32.gmra.mxu0 %v1632
      %v1747 = vpop.f32.mrf.mxu0
      %v1748 = vadd.f32 %v1575, %v1747
      %1749 = vmatmul.f32.gmra.mxu0 %v1635
      %v1750 = vpop.f32.mrf.mxu0
      %v1751 = vadd.f32 %v1575, %v1750
      %1752 = vmatmul.f32.gmra.mxu0 %v1638
      %v1753 = vpop.f32.mrf.mxu0
      %v1754 = vadd.f32 %v1575, %v1753
      %1755 = vmatmul.f32.gmra.mxu0 %v1641
      %v1756 = vpop.f32.mrf.mxu0
      %v1757 = vadd.f32 %v1575, %v1756
      %1758 = vmatmul.f32.gmra.mxu0 %v1644
      %v1759 = vpop.f32.mrf.mxu0
      %v1760 = vadd.f32 %v1575, %v1759
      %1761 = vmatmul.f32.gmra.mxu0 %v1647
      %v1762 = vpop.f32.mrf.mxu0
      %v1763 = vadd.f32 %v1575, %v1762
      %1764 = vmatmul.f32.gmra.mxu0 %v1650
      %v1765 = vpop.f32.mrf.mxu0
      %v1766 = vadd.f32 %v1575, %v1765
      %1767 = vmatmul.f32.gmra.mxu0 %v1653
      %v1768 = vpop.f32.mrf.mxu0
      %v1769 = vadd.f32 %v1575, %v1768
      %1770 = vmatmul.f32.gmra.mxu0 %v1656
      %v1771 = vpop.f32.mrf.mxu0
      %v1772 = vadd.f32 %v1575, %v1771
      %1773 = vmatmul.f32.gmra.mxu0 %v1659
      %v1774 = vpop.f32.mrf.mxu0
      %v1775 = vadd.f32 %v1575, %v1774
      %1776 = vmatmul.f32.gmra.mxu0 %v1662
      %v1777 = vpop.f32.mrf.mxu0
      %v1778 = vadd.f32 %v1575, %v1777
      %1779 = vmatmul.f32.gmra.mxu0 %v1665
      %v1780 = vpop.f32.mrf.mxu0
      %v1781 = vadd.f32 %v1575, %v1780
      %1782 = vmatmul.f32.gmra.mxu0 %v1668
      %v1783 = vpop.f32.mrf.mxu0
      %v1784 = vadd.f32 %v1575, %v1783
      %1785 = vmatmul.f32.gmra.mxu0 %v1671
      %v1786 = vpop.f32.mrf.mxu0
      %v1787 = vadd.f32 %v1575, %v1786
      %1788 = vdwg.mxu0
      %v1789 = vmax.f32 %v1694, 0.0
      %v1790 = vmax.f32 %v1697, 0.0
      %v1791 = vmax.f32 %v1700, 0.0
      %v1792 = vmax.f32 %v1703, 0.0
      %v1793 = vmax.f32 %v1706, 0.0
      %v1794 = vmax.f32 %v1709, 0.0
      %v1795 = vmax.f32 %v1712, 0.0
      %v1796 = vmax.f32 %v1715, 0.0
      %v1797 = vmax.f32 %v1718, 0.0
      %v1798 = vmax.f32 %v1721, 0.0
      %v1799 = vmax.f32 %v1724, 0.0
      %v1800 = vmax.f32 %v1727, 0.0
      %v1801 = vmax.f32 %v1730, 0.0
      %v1802 = vmax.f32 %v1733, 0.0
      %v1803 = vmax.f32 %v1736, 0.0
      %v1804 = vmax.f32 %v1739, 0.0
      %v1805 = vmax.f32 %v1742, 0.0
      %v1806 = vmax.f32 %v1745, 0.0
      %v1807 = vmax.f32 %v1748, 0.0
      %v1808 = vmax.f32 %v1751, 0.0
      %v1809 = vmax.f32 %v1754, 0.0
      %v1810 = vmax.f32 %v1757, 0.0
      %v1811 = vmax.f32 %v1760, 0.0
      %v1812 = vmax.f32 %v1763, 0.0
      %v1813 = vmax.f32 %v1766, 0.0
      %v1814 = vmax.f32 %v1769, 0.0
      %v1815 = vmax.f32 %v1772, 0.0
      %v1816 = vmax.f32 %v1775, 0.0
      %v1817 = vmax.f32 %v1778, 0.0
      %v1818 = vmax.f32 %v1781, 0.0
      %v1819 = vmax.f32 %v1784, 0.0
      %v1820 = vmax.f32 %v1787, 0.0
      %1821 = vst.msk [vmem:[%s251] sm:$0xff] %vm385, %v252
      %1822 = vst.msk [vmem:[%s251 + $0x8] sm:$0xff] %vm385, %v253
      %1823 = vst.msk [vmem:[%s251 + $0x10] sm:$0xff] %vm385, %v254
      %1824 = vst.msk [vmem:[%s251 + $0x18] sm:$0xff] %vm385, %v255
      %1825 = vst.msk [vmem:[%s251 + $0x20] sm:$0xff] %vm385, %v256
      %1826 = vst.msk [vmem:[%s251 + $0x28] sm:$0xff] %vm385, %v257
      %1827 = vst.msk [vmem:[%s251 + $0x30] sm:$0xff] %vm385, %v258
      %1828 = vst.msk [vmem:[%s251 + $0x38] sm:$0xff] %vm385, %v259
      %1829 = vst.msk [vmem:[%s251 + $0x40] sm:$0xff] %vm385, %v260
      %1830 = vst.msk [vmem:[%s251 + $0x48] sm:$0xff] %vm385, %v261
      %1831 = vst.msk [vmem:[%s251 + $0x50] sm:$0xff] %vm385, %v262
      %1832 = vst.msk [vmem:[%s251 + $0x58] sm:$0xff] %vm385, %v263
      %1833 = vst.msk [vmem:[%s251 + $0x60] sm:$0xff] %vm385, %v264
      %1834 = vst.msk [vmem:[%s251 + $0x68] sm:$0xff] %vm385, %v265
      %1835 = vst.msk [vmem:[%s251 + $0x70] sm:$0xff] %vm385, %v266
      %1836 = vst.msk [vmem:[%s251 + $0x78] sm:$0xff] %vm385, %v267
      %1837 = vst.msk [vmem:[%s251 + $0x80] sm:$0xff] %vm385, %v268
      %1838 = vst.msk [vmem:[%s251 + $0x88] sm:$0xff] %vm385, %v269
      %1839 = vst.msk [vmem:[%s251 + $0x90] sm:$0xff] %vm385, %v270
      %1840 = vst.msk [vmem:[%s251 + $0x98] sm:$0xff] %vm385, %v271
      %1841 = vst.msk [vmem:[%s251 + $0xa0] sm:$0xff] %vm385, %v272
      %1842 = vst.msk [vmem:[%s251 + $0xa8] sm:$0xff] %vm385, %v273
      %1843 = vst.msk [vmem:[%s251 + $0xb0] sm:$0xff] %vm385, %v274
      %1844 = vst.msk [vmem:[%s251 + $0xb8] sm:$0xff] %vm385, %v275
      %1845 = vst.msk [vmem:[%s251 + $0xc0] sm:$0xff] %vm385, %v276
      %1846 = vst.msk [vmem:[%s251 + $0xc8] sm:$0xff] %vm385, %v277
      %1847 = vst.msk [vmem:[%s251 + $0xd0] sm:$0xff] %vm385, %v278
      %1848 = vst.msk [vmem:[%s251 + $0xd8] sm:$0xff] %vm385, %v279
      %1849 = vst.msk [vmem:[%s251 + $0xe0] sm:$0xff] %vm385, %v280
      %1850 = vst.msk [vmem:[%s251 + $0xe8] sm:$0xff] %vm385, %v281
      %1851 = vst.msk [vmem:[%s251 + $0xf0] sm:$0xff] %vm385, %v282
      %1852 = vst.msk [vmem:[%s251 + $0xf8] sm:$0xff] %vm385, %v283
      %1885 = vrot.lane.b32.xlu0 %v1789, 2
      %v1886 = vpop.permute.xlu0 %1885
      %1887 = vrot.lane.b32.xlu0 %v1790, 2
      %v1888 = vpop.permute.xlu0 %1887
      %1889 = vrot.lane.b32.xlu0 %v1791, 2
      %v1890 = vpop.permute.xlu0 %1889
      %1891 = vrot.lane.b32.xlu0 %v1792, 2
      %v1892 = vpop.permute.xlu0 %1891
      %1893 = vrot.lane.b32.xlu0 %v1793, 2
      %v1894 = vpop.permute.xlu0 %1893
      %1895 = vrot.lane.b32.xlu0 %v1794, 2
      %v1896 = vpop.permute.xlu0 %1895
      %1897 = vrot.lane.b32.xlu0 %v1795, 2
      %v1898 = vpop.permute.xlu0 %1897
      %1899 = vrot.lane.b32.xlu0 %v1796, 2
      %v1900 = vpop.permute.xlu0 %1899
      %1901 = vrot.lane.b32.xlu0 %v1797, 2
      %v1902 = vpop.permute.xlu0 %1901
      %1903 = vrot.lane.b32.xlu0 %v1798, 2
      %v1904 = vpop.permute.xlu0 %1903
      %1905 = vrot.lane.b32.xlu0 %v1799, 2
      %v1906 = vpop.permute.xlu0 %1905
      %1907 = vrot.lane.b32.xlu0 %v1800, 2
      %v1908 = vpop.permute.xlu0 %1907
      %1909 = vrot.lane.b32.xlu0 %v1801, 2
      %v1910 = vpop.permute.xlu0 %1909
      %1911 = vrot.lane.b32.xlu0 %v1802, 2
      %v1912 = vpop.permute.xlu0 %1911
      %1913 = vrot.lane.b32.xlu0 %v1803, 2
      %v1914 = vpop.permute.xlu0 %1913
      %1915 = vrot.lane.b32.xlu0 %v1804, 2
      %v1916 = vpop.permute.xlu0 %1915
      %1917 = vrot.lane.b32.xlu0 %v1805, 2
      %v1918 = vpop.permute.xlu0 %1917
      %1919 = vrot.lane.b32.xlu0 %v1806, 2
      %v1920 = vpop.permute.xlu0 %1919
      %1921 = vrot.lane.b32.xlu0 %v1807, 2
      %v1922 = vpop.permute.xlu0 %1921
      %1923 = vrot.lane.b32.xlu0 %v1808, 2
      %v1924 = vpop.permute.xlu0 %1923
      %1925 = vrot.lane.b32.xlu0 %v1809, 2
      %v1926 = vpop.permute.xlu0 %1925
      %1927 = vrot.lane.b32.xlu0 %v1810, 2
      %v1928 = vpop.permute.xlu0 %1927
      %1929 = vrot.lane.b32.xlu0 %v1811, 2
      %v1930 = vpop.permute.xlu0 %1929
      %1931 = vrot.lane.b32.xlu0 %v1812, 2
      %v1932 = vpop.permute.xlu0 %1931
      %1933 = vrot.lane.b32.xlu0 %v1813, 2
      %v1934 = vpop.permute.xlu0 %1933
      %1935 = vrot.lane.b32.xlu0 %v1814, 2
      %v1936 = vpop.permute.xlu0 %1935
      %1937 = vrot.lane.b32.xlu0 %v1815, 2
      %v1938 = vpop.permute.xlu0 %1937
      %1939 = vrot.lane.b32.xlu0 %v1816, 2
      %v1940 = vpop.permute.xlu0 %1939
      %1941 = vrot.lane.b32.xlu0 %v1817, 2
      %v1942 = vpop.permute.xlu0 %1941
      %1943 = vrot.lane.b32.xlu0 %v1818, 2
      %v1944 = vpop.permute.xlu0 %1943
      %1945 = vrot.lane.b32.xlu0 %v1819, 2
      %v1946 = vpop.permute.xlu0 %1945
      %1947 = vrot.lane.b32.xlu0 %v1820, 2
      %v1948 = vpop.permute.xlu0 %1947
      %vm1981 = vcmask 31760
      %1982 = vst.msk [vmem:[%s251] sm:$0xff] %vm1981, %v1886
      %1983 = vst.msk [vmem:[%s251 + $0x8] sm:$0xff] %vm1981, %v1888
      %1984 = vst.msk [vmem:[%s251 + $0x10] sm:$0xff] %vm1981, %v1890
      %1985 = vst.msk [vmem:[%s251 + $0x18] sm:$0xff] %vm1981, %v1892
      %1986 = vst.msk [vmem:[%s251 + $0x20] sm:$0xff] %vm1981, %v1894
      %1987 = vst.msk [vmem:[%s251 + $0x28] sm:$0xff] %vm1981, %v1896
      %1988 = vst.msk [vmem:[%s251 + $0x30] sm:$0xff] %vm1981, %v1898
      %1989 = vst.msk [vmem:[%s251 + $0x38] sm:$0xff] %vm1981, %v1900
      %1990 = vst.msk [vmem:[%s251 + $0x40] sm:$0xff] %vm1981, %v1902
      %1991 = vst.msk [vmem:[%s251 + $0x48] sm:$0xff] %vm1981, %v1904
      %1992 = vst.msk [vmem:[%s251 + $0x50] sm:$0xff] %vm1981, %v1906
      %1993 = vst.msk [vmem:[%s251 + $0x58] sm:$0xff] %vm1981, %v1908
      %1994 = vst.msk [vmem:[%s251 + $0x60] sm:$0xff] %vm1981, %v1910
      %1995 = vst.msk [vmem:[%s251 + $0x68] sm:$0xff] %vm1981, %v1912
      %1996 = vst.msk [vmem:[%s251 + $0x70] sm:$0xff] %vm1981, %v1914
      %1997 = vst.msk [vmem:[%s251 + $0x78] sm:$0xff] %vm1981, %v1916
      %1998 = vst.msk [vmem:[%s251 + $0x80] sm:$0xff] %vm1981, %v1918
      %1999 = vst.msk [vmem:[%s251 + $0x88] sm:$0xff] %vm1981, %v1920
      %2000 = vst.msk [vmem:[%s251 + $0x90] sm:$0xff] %vm1981, %v1922
      %2001 = vst.msk [vmem:[%s251 + $0x98] sm:$0xff] %vm1981, %v1924
      %2002 = vst.msk [vmem:[%s251 + $0xa0] sm:$0xff] %vm1981, %v1926
      %2003 = vst.msk [vmem:[%s251 + $0xa8] sm:$0xff] %vm1981, %v1928
      %2004 = vst.msk [vmem:[%s251 + $0xb0] sm:$0xff] %vm1981, %v1930
      %2005 = vst.msk [vmem:[%s251 + $0xb8] sm:$0xff] %vm1981, %v1932
      %2006 = vst.msk [vmem:[%s251 + $0xc0] sm:$0xff] %vm1981, %v1934
      %2007 = vst.msk [vmem:[%s251 + $0xc8] sm:$0xff] %vm1981, %v1936
      %2008 = vst.msk [vmem:[%s251 + $0xd0] sm:$0xff] %vm1981, %v1938
      %2009 = vst.msk [vmem:[%s251 + $0xd8] sm:$0xff] %vm1981, %v1940
      %2010 = vst.msk [vmem:[%s251 + $0xe0] sm:$0xff] %vm1981, %v1942
      %2011 = vst.msk [vmem:[%s251 + $0xe8] sm:$0xff] %vm1981, %v1944
      %2012 = vst.msk [vmem:[%s251 + $0xf0] sm:$0xff] %vm1981, %v1946
      %2013 = vst.msk [vmem:[%s251 + $0xf8] sm:$0xff] %vm1981, %v1948
      %p2014 = scmp.lt.s32.totalorder %s17, 1
      %s2015 = scalar_select %p2014, %s17, 1
      %s2016 = smul.addr %s2015, 32
      %s2017 = smul.addr %s2016, 8
      %s2018 = scalar_lea.vmem %s6, %s2017
      // Predicated region
      $region45: #{shuffle_block_forward.1} parent=43 // pred_check
        %p2019 = pneg %p166
      $region46: #{shuffle_block_forward.1} parent=43 // pred_check_branch
        %2021 = sbr.rel (%p2019) target = $region48
      $region47: #{shuffle_block_forward.1} parent=43 // pred_region
        _
      $region48: #{shuffle_block_forward.1} parent=43 // pred_fallthru
        _
    $region44: #{shuffle_block_forward.1} parent=5 // pred_fallthru
      _
    %p2022 = scmp.le.s32.totalorder 2, %s12
    // Predicated region
    $region49: #{shuffle_block_forward.1} parent=5 // pred_check
      %p2023 = pneg %p2022
    $region50: #{shuffle_block_forward.1} parent=5 // pred_check_branch
      %2025 = sbr.rel (%p2023) target = $region52
    $region51: #{shuffle_block_forward.1} parent=5 // pred_region
      %s2026 = ssub.s32 %s12, 2
      // Predicated region
      $region53: #{shuffle_block_forward.1} parent=51 // pred_check
        %p2027 = pneg %p172
      $region54: #{shuffle_block_forward.1} parent=51 // pred_check_branch
        %2029 = sbr.rel (%p2027) target = $region56
      $region55: #{shuffle_block_forward.1} parent=51 // pred_region
        %p2030 = scmp.lt.s32.totalorder %s18, 1
        %s2031 = scalar_select %p2030, %s18, 1
        %s2032 = smul.addr %s2031, 32
        %s2033 = smul.addr %s2032, 8
        %s2034 = scalar_lea.vmem %s6, %s2033
      $region56: #{shuffle_block_forward.1} parent=51 // pred_fallthru
        _
    $region52: #{shuffle_block_forward.1} parent=5 // pred_fallthru
      _
  $region6: #{shuffle_block_forward.1} parent=0 // loop_footer
    %s16 = sadd.s32 1, %s12
  $region7: #{shuffle_block_forward.1} parent=0 // loop_footer_branch
    %11 = sbr.rel target = $region3
  $region8: #{shuffle_block_forward.1} parent=0 // loop_exit
    _

</llo_original>
